<compile_context>
chip_gen: v7x
topology: tpu7x:2x2x1
jax: 0.10.0
libtpu: 0.0.40
codegen_flags: <defaults>
</compile_context>

<pallas_src>
import functools

import jax
import jax.numpy as jnp
import numpy as np
from jax.experimental import pallas as pl
from jax.experimental.pallas import tpu as pltpu


def _baseconv_kernel(x_ref, w_ref, scale_ref, bias_ref, o_ref, scratch_ref,
                     *, ksize, stride, act, use_im2col):
    """One (batch, row-tile, Cout-tile) grid step.

    x_ref:       (1, win_h, Wp, Cin)  input row window (halo included), NHWC
    w_ref:       (K*K*Cin, Ct)        GEMM weights (taps major, Cin minor)
    scale_ref:   (1, Ct)              folded BN scale = gamma / sqrt(var + eps)
    bias_ref:    (1, Ct)              folded BN bias  = beta - mean * scale
    o_ref:       (1, TH, Wo, Ct)      output tile (lane-dense Ct)
    scratch_ref: im2col patch (TH*Wo, K*K*Cin) or f32 accumulator (TH*Wo, Ct)
    """
    K = ksize
    _, TH, Wo, TC = o_ref.shape
    cin = x_ref.shape[-1]

    if stride == 1:
        def tap(kh, kw):
            # Slice the ref per tap (one sliced load); no materialized shifted copies.
            return x_ref[0, kh:kh + TH, kw:kw + Wo, :]
    else:
        # TODO(synk): for stride > 1 a space-to-depth pre-split in the wrapper would keep
        # the inner GEMM stride-1 and avoid XLU-heavy strided slices.
        xv = x_ref[0]

        def tap(kh, kw):
            return jax.lax.slice(
                xv, (kh, kw, 0),
                (kh + (TH - 1) * stride + 1, kw + (Wo - 1) * stride + 1, cin),
                (stride, stride, 1))

    if use_im2col:
        # Shallow Cin: fold all K*K taps into one deep MXU contraction.
        for t in range(K * K):
            kh, kw = divmod(t, K)
            scratch_ref[:, t * cin:(t + 1) * cin] = tap(kh, kw).reshape(TH * Wo, cin)
        acc = jnp.dot(scratch_ref[...], w_ref[...],
                      preferred_element_type=jnp.float32)
    else:
        # Deep Cin: per-tap GEMMs already fill the MXU contraction; accumulate into a
        # VMEM f32 scratch to bound vreg pressure across the unrolled tap loop.
        scratch_ref[...] = jnp.zeros_like(scratch_ref)
        for t in range(K * K):
            kh, kw = divmod(t, K)
            patch = tap(kh, kw).reshape(TH * Wo, cin)
            scratch_ref[...] += jnp.dot(patch, w_ref[t * cin:(t + 1) * cin, :],
                                        preferred_element_type=jnp.float32)
        acc = scratch_ref[...]

    # Folded BatchNorm (inference running stats) then activation, in f32.
    y = acc * scale_ref[0, :] + bias_ref[0, :]
    if act == "silu":
        y = y * jax.nn.sigmoid(y)
    elif act == "relu":
        y = jnp.maximum(y, 0.0)
    elif act == "lrelu":
        y = jnp.where(y >= 0.0, y, 0.1 * y)
    elif act == "hsilu":
        y = y * jnp.clip(y / 6.0 + 0.5, 0.0, 1.0)
    elif act == "identity":
        pass
    else:
        raise AttributeError("Unsupported act type: {}".format(act))

    o_ref[...] = y.reshape(1, TH, Wo, TC).astype(o_ref.dtype)


def base_conv(x_nchw, weight_oihw, gamma, beta, running_mean, running_var,
              *, stride=1, eps=1e-3, act="silu", row_tile=None):
    """BaseConv forward: act(bn(conv(x))).  NCHW in / NCHW out like PyTorch.

    Note: eps defaults to 1e-3 to match BaseConv's BatchNorm2d(eps=0.001).
    """
    cout, cin_w, K, K2 = weight_oihw.shape
    assert K == K2, "square kernels only"
    n, cin, H, W = x_nchw.shape
    # TODO(synk): groups > 1 (grouped / depthwise conv) is not implemented.
    assert cin_w == cin, "groups > 1 not supported (weight Cin must equal input Cin)"
    stride = int(stride)
    pad = (K - 1) // 2

    Ho = (H + 2 * pad - K) // stride + 1
    Wo = (W + 2 * pad - K) // stride + 1
    Wp = W + 2 * pad

    # Layout glue (kept adjacent to the pallas_call so it can live under one jit).
    # TODO(synk): keep the surrounding model NHWC to drop these full-tensor transposes.
    x = jnp.transpose(x_nchw, (0, 2, 3, 1))                          # NHWC
    w2d = jnp.transpose(weight_oihw, (2, 3, 1, 0)).reshape(K * K * cin, cout)

    itemsize = x.dtype.itemsize
    kkc = K * K * cin

    # Lane-dense output channels: pad Cout to a multiple of 128; tile at 128/256.
    LANE = 128
    cout_p = ((cout + LANE - 1) // LANE) * LANE
    tc = 256 if cout_p % 256 == 0 else 128

    # One deep contraction (im2col) when Cin is shallow relative to the MXU depth.
    use_im2col = kkc <= 1024

    # Output-row tile: bound double-buffered blocks + scratch to ~16 MiB so the whole
    # pipeline fits comfortably in v7x's 64 MiB VMEM (headroom on v5e/v6e).
    scratch_row = Wo * (kkc * itemsize if use_im2col else tc * 4)
    row_cost = (2 * stride * Wp * cin * itemsize     # double-buffered input rows
                + 2 * Wo * tc * itemsize             # double-buffered output rows
                + scratch_row)
    if row_tile is None:
        th = int(max(1, min(Ho, 64, (16 * 1024 * 1024) // max(row_cost, 1))))
    else:
        th = int(max(1, min(Ho, row_tile)))
    n_th = -(-Ho // th)
    th = -(-Ho // n_th)          # rebalance so the last tile is not mostly padding
    n_th = -(-Ho // th)
    ho_pad = n_th * th

    # Pre-build overlapping input row-windows (halo) so each grid block is a plain
    # Blocked tile and auto-pipelines.
    win_h = (th - 1) * stride + K
    hp_need = (ho_pad - 1) * stride + K
    pad_bottom = max(pad, hp_need - H - pad)
    xp = jnp.pad(x, ((0, 0), (pad, pad_bottom), (pad, pad), (0, 0)))
    row_idx = (jnp.arange(n_th)[:, None] * (th * stride)
               + jnp.arange(win_h)[None, :]).reshape(-1)
    xw = jnp.take(xp, row_idx, axis=1).reshape(n * n_th, win_h, Wp, cin)

    # Fold BN (inference) into per-channel scale/bias; pad weights/scale/bias to Cout_p.
    scale = (gamma / jnp.sqrt(running_var + eps)).astype(jnp.float32)
    bias = (beta - running_mean * scale).astype(jnp.float32)
    w2d_p = jnp.zeros((kkc, cout_p), w2d.dtype).at[:, :cout].set(w2d)
    scale_p = jnp.zeros((1, cout_p), jnp.float32).at[0, :cout].set(scale)
    bias_p = jnp.zeros((1, cout_p), jnp.float32).at[0, :cout].set(bias)

    if use_im2col:
        scratch = pltpu.VMEM((th * Wo, kkc), x.dtype)
    else:
        scratch = pltpu.VMEM((th * Wo, tc), jnp.float32)

    # Explicit VMEM budget (scoped default is 32 MiB; v7x physical is 64 MiB).
    est_vmem = (2 * win_h * Wp * cin * itemsize
                + 2 * th * Wo * tc * itemsize
                + 2 * kkc * tc * w2d_p.dtype.itemsize
                + 8 * cout_p
                + th * Wo * (kkc * itemsize if use_im2col else tc * 4))
    vmem_limit = int(min(56 * 1024 * 1024, max(32 * 1024 * 1024, 2 * est_vmem)))

    kernel = functools.partial(_baseconv_kernel, ksize=K, stride=stride, act=act,
                               use_im2col=use_im2col)

    out = pl.pallas_call(
        kernel,
        out_shape=jax.ShapeDtypeStruct((n, ho_pad, Wo, cout_p), x.dtype),
        # Cout tile innermost: the input window block index is unchanged across it,
        # so Pallas skips re-fetching the window.
        grid=(n, n_th, cout_p // tc),
        in_specs=[
            pl.BlockSpec((1, win_h, Wp, cin), lambda b, t, c: (b * n_th + t, 0, 0, 0)),
            pl.BlockSpec((kkc, tc), lambda b, t, c: (0, c)),
            pl.BlockSpec((1, tc), lambda b, t, c: (0, c)),
            pl.BlockSpec((1, tc), lambda b, t, c: (0, c)),
        ],
        out_specs=pl.BlockSpec((1, th, Wo, tc), lambda b, t, c: (b, t, 0, c)),
        scratch_shapes=[scratch],
        compiler_params=pltpu.CompilerParams(
            dimension_semantics=("parallel", "parallel", "parallel"),
            vmem_limit_bytes=vmem_limit),
    )(xw, w2d_p, scale_p, bias_p)

    out = out[:, :Ho, :, :cout]
    return jnp.transpose(out, (0, 3, 1, 2))


def _reference(x_nchw, weight_oihw, gamma, beta, running_mean, running_var,
               *, stride=1, eps=1e-3):
    """Pure-JAX reference (conv + inference BN + SiLU), NCHW."""
    y = jax.lax.conv_general_dilated(
        x_nchw.astype(jnp.float32), weight_oihw.astype(jnp.float32),
        window_strides=(stride, stride),
        padding=[((weight_oihw.shape[2] - 1) // 2,) * 2] * 2,
        dimension_numbers=("NCHW", "OIHW", "NCHW"))
    scale = (gamma / jnp.sqrt(running_var + eps)).reshape(1, -1, 1, 1)
    bias = (beta - running_mean * gamma / jnp.sqrt(running_var + eps)).reshape(1, -1, 1, 1)
    y = y * scale + bias
    return y * jax.nn.sigmoid(y)


if __name__ == "__main__":
    key = jax.random.PRNGKey(0)
    k_x, k_w, k_g, k_b, k_m, k_v = jax.random.split(key, 6)

    # Small shapes: batch=2, in_channels=4, out_channels=8, spatial=16, ksize=3, stride=1.
    N, CIN, COUT, H, W, K, STRIDE = 2, 4, 8, 16, 16, 3, 1

    x = jax.random.normal(k_x, (N, CIN, H, W), dtype=jnp.float32)
    weight = jax.random.normal(k_w, (COUT, CIN, K, K), dtype=jnp.float32) * 0.1
    gamma = jax.random.normal(k_g, (COUT,), dtype=jnp.float32) * 0.1 + 1.0
    beta = jax.random.normal(k_b, (COUT,), dtype=jnp.float32) * 0.1
    running_mean = jax.random.normal(k_m, (COUT,), dtype=jnp.float32) * 0.1
    running_var = jax.random.uniform(k_v, (COUT,), dtype=jnp.float32, minval=0.5, maxval=1.5)

    ref = jax.block_until_ready(
        _reference(x, weight, gamma, beta, running_mean, running_var,
                   stride=STRIDE, eps=1e-3))

    # Default tiling (single row tile at this size).
    out = jax.block_until_ready(
        base_conv(x, weight, gamma, beta, running_mean, running_var,
                  stride=STRIDE, eps=1e-3, act="silu"))
    np.testing.assert_allclose(np.asarray(out), np.asarray(ref), rtol=2e-3, atol=2e-3)

    # Forced multi-tile run: exercises the halo row-window path (n_th > 1).
    out_tiled = jax.block_until_ready(
        base_conv(x, weight, gamma, beta, running_mean, running_var,
                  stride=STRIDE, eps=1e-3, act="silu", row_tile=8))
    np.testing.assert_allclose(np.asarray(out_tiled), np.asarray(ref), rtol=2e-3, atol=2e-3)

    print("KERNEL_OK")
</pallas_src>

<mosaic_0001>
module attributes {stable_mosaic.version = 11 : i64} {
  func.func @_baseconv_kernel(%arg0: i32, %arg1: i32, %arg2: i32, %arg3: memref<1x18x18x4xf32, #tpu.memory_space<vmem>>, %arg4: memref<36x128xf32, #tpu.memory_space<vmem>>, %arg5: memref<1x128xf32, #tpu.memory_space<vmem>>, %arg6: memref<1x128xf32, #tpu.memory_space<vmem>>, %arg7: memref<1x16x16x128xf32, #tpu.memory_space<vmem>>, %arg8: memref<256x36xf32, #tpu.memory_space<vmem>>) attributes {dimension_semantics = [#tpu.dimension_semantics<parallel>, #tpu.dimension_semantics<parallel>, #tpu.dimension_semantics<parallel>], iteration_bounds = array<i64: 2, 1, 1>, scalar_prefetch = 0 : i64, scratch_operands = 1 : i64, tpu.core_type = #tpu.core_type<tc>, window_params = [{transform_indices = @transform_0, window_bounds = array<i64: 1, 18, 18, 4>}, {transform_indices = @transform_1, window_bounds = array<i64: 36, 128>}, {transform_indices = @transform_2, window_bounds = array<i64: 1, 128>}, {transform_indices = @transform_3, window_bounds = array<i64: 1, 128>}, {transform_indices = @transform_4, window_bounds = array<i64: 1, 16, 16, 128>}]} {
    %c0 = arith.constant 0 : index
    %c0_0 = arith.constant 0 : index
    %c0_1 = arith.constant 0 : index
    %c0_2 = arith.constant 0 : index
    %0 = vector.load %arg3[%c0, %c0_0, %c0_1, %c0_2] : memref<1x18x18x4xf32, #tpu.memory_space<vmem>>, vector<1x16x16x4xf32>
    %1 = vector.shape_cast %0 : vector<1x16x16x4xf32> to vector<16x16x4xf32>
    %2 = vector.shape_cast %1 : vector<16x16x4xf32> to vector<256x4xf32>
    %c0_3 = arith.constant 0 : index
    %c0_4 = arith.constant 0 : index
    %3 = vector.load %arg8[%c0_3, %c0_4] : memref<256x36xf32, #tpu.memory_space<vmem>>, vector<256x4xf32>
    tpu.vector_store %arg8[%c0_3, %c0_4], %2 {strides = array<i32>} : memref<256x36xf32, #tpu.memory_space<vmem>>, vector<256x4xf32>,
    %c0_5 = arith.constant 0 : index
    %c0_6 = arith.constant 0 : index
    %c1 = arith.constant 1 : index
    %c0_7 = arith.constant 0 : index
    %4 = vector.load %arg3[%c0_5, %c0_6, %c1, %c0_7] : memref<1x18x18x4xf32, #tpu.memory_space<vmem>>, vector<1x16x16x4xf32>
    %5 = vector.shape_cast %4 : vector<1x16x16x4xf32> to vector<16x16x4xf32>
    %6 = vector.shape_cast %5 : vector<16x16x4xf32> to vector<256x4xf32>
    %c0_8 = arith.constant 0 : index
    %c4 = arith.constant 4 : index
    %7 = vector.load %arg8[%c0_8, %c4] : memref<256x36xf32, #tpu.memory_space<vmem>>, vector<256x4xf32>
    tpu.vector_store %arg8[%c0_8, %c4], %6 {strides = array<i32>} : memref<256x36xf32, #tpu.memory_space<vmem>>, vector<256x4xf32>,
    %c0_9 = arith.constant 0 : index
    %c0_10 = arith.constant 0 : index
    %c2 = arith.constant 2 : index
    %c0_11 = arith.constant 0 : index
    %8 = vector.load %arg3[%c0_9, %c0_10, %c2, %c0_11] : memref<1x18x18x4xf32, #tpu.memory_space<vmem>>, vector<1x16x16x4xf32>
    %9 = vector.shape_cast %8 : vector<1x16x16x4xf32> to vector<16x16x4xf32>
    %10 = vector.shape_cast %9 : vector<16x16x4xf32> to vector<256x4xf32>
    %c0_12 = arith.constant 0 : index
    %c8 = arith.constant 8 : index
    %11 = vector.load %arg8[%c0_12, %c8] : memref<256x36xf32, #tpu.memory_space<vmem>>, vector<256x4xf32>
    tpu.vector_store %arg8[%c0_12, %c8], %10 {strides = array<i32>} : memref<256x36xf32, #tpu.memory_space<vmem>>, vector<256x4xf32>,
    %c0_13 = arith.constant 0 : index
    %c1_14 = arith.constant 1 : index
    %c0_15 = arith.constant 0 : index
    %c0_16 = arith.constant 0 : index
    %12 = vector.load %arg3[%c0_13, %c1_14, %c0_15, %c0_16] : memref<1x18x18x4xf32, #tpu.memory_space<vmem>>, vector<1x16x16x4xf32>
    %13 = vector.shape_cast %12 : vector<1x16x16x4xf32> to vector<16x16x4xf32>
    %14 = vector.shape_cast %13 : vector<16x16x4xf32> to vector<256x4xf32>
    %c0_17 = arith.constant 0 : index
    %c12 = arith.constant 12 : index
    %15 = vector.load %arg8[%c0_17, %c12] : memref<256x36xf32, #tpu.memory_space<vmem>>, vector<256x4xf32>
    tpu.vector_store %arg8[%c0_17, %c12], %14 {strides = array<i32>} : memref<256x36xf32, #tpu.memory_space<vmem>>, vector<256x4xf32>,
    %c0_18 = arith.constant 0 : index
    %c1_19 = arith.constant 1 : index
    %c1_20 = arith.constant 1 : index
    %c0_21 = arith.constant 0 : index
    %16 = vector.load %arg3[%c0_18, %c1_19, %c1_20, %c0_21] : memref<1x18x18x4xf32, #tpu.memory_space<vmem>>, vector<1x16x16x4xf32>
    %17 = vector.shape_cast %16 : vector<1x16x16x4xf32> to vector<16x16x4xf32>
    %18 = vector.shape_cast %17 : vector<16x16x4xf32> to vector<256x4xf32>
    %c0_22 = arith.constant 0 : index
    %c16 = arith.constant 16 : index
    %19 = vector.load %arg8[%c0_22, %c16] : memref<256x36xf32, #tpu.memory_space<vmem>>, vector<256x4xf32>
    tpu.vector_store %arg8[%c0_22, %c16], %18 {strides = array<i32>} : memref<256x36xf32, #tpu.memory_space<vmem>>, vector<256x4xf32>,
    %c0_23 = arith.constant 0 : index
    %c1_24 = arith.constant 1 : index
    %c2_25 = arith.constant 2 : index
    %c0_26 = arith.constant 0 : index
    %20 = vector.load %arg3[%c0_23, %c1_24, %c2_25, %c0_26] : memref<1x18x18x4xf32, #tpu.memory_space<vmem>>, vector<1x16x16x4xf32>
    %21 = vector.shape_cast %20 : vector<1x16x16x4xf32> to vector<16x16x4xf32>
    %22 = vector.shape_cast %21 : vector<16x16x4xf32> to vector<256x4xf32>
    %c0_27 = arith.constant 0 : index
    %c20 = arith.constant 20 : index
    %23 = vector.load %arg8[%c0_27, %c20] : memref<256x36xf32, #tpu.memory_space<vmem>>, vector<256x4xf32>
    tpu.vector_store %arg8[%c0_27, %c20], %22 {strides = array<i32>} : memref<256x36xf32, #tpu.memory_space<vmem>>, vector<256x4xf32>,
    %c0_28 = arith.constant 0 : index
    %c2_29 = arith.constant 2 : index
    %c0_30 = arith.constant 0 : index
    %c0_31 = arith.constant 0 : index
    %24 = vector.load %arg3[%c0_28, %c2_29, %c0_30, %c0_31] : memref<1x18x18x4xf32, #tpu.memory_space<vmem>>, vector<1x16x16x4xf32>
    %25 = vector.shape_cast %24 : vector<1x16x16x4xf32> to vector<16x16x4xf32>
    %26 = vector.shape_cast %25 : vector<16x16x4xf32> to vector<256x4xf32>
    %c0_32 = arith.constant 0 : index
    %c24 = arith.constant 24 : index
    %27 = vector.load %arg8[%c0_32, %c24] : memref<256x36xf32, #tpu.memory_space<vmem>>, vector<256x4xf32>
    tpu.vector_store %arg8[%c0_32, %c24], %26 {strides = array<i32>} : memref<256x36xf32, #tpu.memory_space<vmem>>, vector<256x4xf32>,
    %c0_33 = arith.constant 0 : index
    %c2_34 = arith.constant 2 : index
    %c1_35 = arith.constant 1 : index
    %c0_36 = arith.constant 0 : index
    %28 = vector.load %arg3[%c0_33, %c2_34, %c1_35, %c0_36] : memref<1x18x18x4xf32, #tpu.memory_space<vmem>>, vector<1x16x16x4xf32>
    %29 = vector.shape_cast %28 : vector<1x16x16x4xf32> to vector<16x16x4xf32>
    %30 = vector.shape_cast %29 : vector<16x16x4xf32> to vector<256x4xf32>
    %c0_37 = arith.constant 0 : index
    %c28 = arith.constant 28 : index
    %31 = vector.load %arg8[%c0_37, %c28] : memref<256x36xf32, #tpu.memory_space<vmem>>, vector<256x4xf32>
    tpu.vector_store %arg8[%c0_37, %c28], %30 {strides = array<i32>} : memref<256x36xf32, #tpu.memory_space<vmem>>, vector<256x4xf32>,
    %c0_38 = arith.constant 0 : index
    %c2_39 = arith.constant 2 : index
    %c2_40 = arith.constant 2 : index
    %c0_41 = arith.constant 0 : index
    %32 = vector.load %arg3[%c0_38, %c2_39, %c2_40, %c0_41] : memref<1x18x18x4xf32, #tpu.memory_space<vmem>>, vector<1x16x16x4xf32>
    %33 = vector.shape_cast %32 : vector<1x16x16x4xf32> to vector<16x16x4xf32>
    %34 = vector.shape_cast %33 : vector<16x16x4xf32> to vector<256x4xf32>
    %c0_42 = arith.constant 0 : index
    %c32 = arith.constant 32 : index
    %35 = vector.load %arg8[%c0_42, %c32] : memref<256x36xf32, #tpu.memory_space<vmem>>, vector<256x4xf32>
    tpu.vector_store %arg8[%c0_42, %c32], %34 {strides = array<i32>} : memref<256x36xf32, #tpu.memory_space<vmem>>, vector<256x4xf32>,
    %c0_43 = arith.constant 0 : index
    %c0_44 = arith.constant 0 : index
    %36 = vector.load %arg8[%c0_43, %c0_44] : memref<256x36xf32, #tpu.memory_space<vmem>>, vector<256x36xf32>
    %c0_45 = arith.constant 0 : index
    %c0_46 = arith.constant 0 : index
    %37 = vector.load %arg4[%c0_45, %c0_46] : memref<36x128xf32, #tpu.memory_space<vmem>>, vector<36x128xf32>
    %cst = arith.constant dense<0.000000e+00> : vector<256x128xf32>
    %38 = tpu.matmul %36, %37, %cst {dimension_numbers = #tpu.dot_dimension_numbers<[1], [0], [0], [1], [0, 0, 1, 1], [], []>} : vector<256x36xf32>, vector<36x128xf32>, vector<256x128xf32> -> vector<256x128xf32>
    %c0_47 = arith.constant 0 : index
    %c0_48 = arith.constant 0 : index
    %39 = vector.load %arg5[%c0_47, %c0_48] : memref<1x128xf32, #tpu.memory_space<vmem>>, vector<1x128xf32>
    %40 = vector.shape_cast %39 : vector<1x128xf32> to vector<128xf32>
    %41 = vector.shape_cast %40 : vector<128xf32> to vector<1x128xf32>
    %42 = vector.broadcast %41 : vector<1x128xf32> to vector<256x128xf32>
    %43 = arith.mulf %38, %42 : vector<256x128xf32>
    %c0_49 = arith.constant 0 : index
    %c0_50 = arith.constant 0 : index
    %44 = vector.load %arg6[%c0_49, %c0_50] : memref<1x128xf32, #tpu.memory_space<vmem>>, vector<1x128xf32>
    %45 = vector.shape_cast %44 : vector<1x128xf32> to vector<128xf32>
    %46 = vector.shape_cast %45 : vector<128xf32> to vector<1x128xf32>
    %47 = vector.broadcast %46 : vector<1x128xf32> to vector<256x128xf32>
    %48 = arith.addf %43, %47 : vector<256x128xf32>
    %49 = arith.negf %48 : vector<256x128xf32>
    %50 = math.exp %49 : vector<256x128xf32>
    %cst_51 = arith.constant 1.000000e+00 : f32
    %51 = vector.broadcast %cst_51 : f32 to vector<256x128xf32>
    %52 = arith.addf %51, %50 : vector<256x128xf32>
    %53 = arith.divf %51, %52 : vector<256x128xf32>
    %54 = arith.mulf %48, %53 : vector<256x128xf32>
    %55 = vector.shape_cast %54 : vector<256x128xf32> to vector<1x16x16x128xf32>
    %c0_52 = arith.constant 0 : index
    %c0_53 = arith.constant 0 : index
    %c0_54 = arith.constant 0 : index
    %c0_55 = arith.constant 0 : index
    %56 = vector.load %arg7[%c0_52, %c0_53, %c0_54, %c0_55] : memref<1x16x16x128xf32, #tpu.memory_space<vmem>>, vector<1x16x16x128xf32>
    tpu.vector_store %arg7[%c0_52, %c0_53, %c0_54, %c0_55], %55 {strides = array<i32>} : memref<1x16x16x128xf32, #tpu.memory_space<vmem>>, vector<1x16x16x128xf32>,
    return
  }
  func.func @transform_0(%arg0: i32, %arg1: i32, %arg2: i32) -> (i32, i32, i32, i32) {
    %c1_i32 = arith.constant 1 : i32
    %0 = arith.muli %arg0, %c1_i32 : i32
    %1 = arith.addi %0, %arg1 : i32
    %c0_i32 = arith.constant 0 : i32
    %c0_i32_0 = arith.constant 0 : i32
    %c0_i32_1 = arith.constant 0 : i32
    %c0_i32_2 = arith.constant 0 : i32
    return %1, %c0_i32, %c0_i32_0, %c0_i32_1 : i32, i32, i32, i32
  }
  func.func @transform_1(%arg0: i32, %arg1: i32, %arg2: i32) -> (i32, i32) {
    %c0_i32 = arith.constant 0 : i32
    %c0_i32_0 = arith.constant 0 : i32
    return %c0_i32, %arg2 : i32, i32
  }
  func.func @transform_2(%arg0: i32, %arg1: i32, %arg2: i32) -> (i32, i32) {
    %c0_i32 = arith.constant 0 : i32
    %c0_i32_0 = arith.constant 0 : i32
    return %c0_i32, %arg2 : i32, i32
  }
  func.func @transform_3(%arg0: i32, %arg1: i32, %arg2: i32) -> (i32, i32) {
    %c0_i32 = arith.constant 0 : i32
    %c0_i32_0 = arith.constant 0 : i32
    return %c0_i32, %arg2 : i32, i32
  }
  func.func @transform_4(%arg0: i32, %arg1: i32, %arg2: i32) -> (i32, i32, i32, i32) {
    %c0_i32 = arith.constant 0 : i32
    %c0_i32_0 = arith.constant 0 : i32
    return %arg0, %arg1, %c0_i32, %arg2 : i32, i32, i32, i32
  }
}

</mosaic_0001>

<llo_original>
// kernel: tpu_custom_call.1
$region0: #{tpu_custom_call.1}
  #allocation0 [shape = 'u32[]', space=smem, size = 0x4, offset = 0x4, fixed_abs, tag = 'smem constant byte address 0x4 - core index']
  #allocation1 [shape = 'u32[144,128]{1,0:T(1,128)}', space=vmem, size = 0x12000, scoped, tag = 'internal scratch']
  #allocation2 [shape = 'f32[256,36]{1,0:T(8,128)}', space=vmem, size = 0x20000, scoped, tag = 'scratch operand']
  %s0 = inlined_call_operand.vmem [shape: f32[2,18,18,4], index: 0, kind: input, shape index: {}]
  %s1 = inlined_call_operand.vmem [shape: f32[36,128], index: 1, kind: input, shape index: {}]
  %s2 = inlined_call_operand.vmem [shape: f32[1,128], index: 2, kind: input, shape index: {}]
  %s3 = inlined_call_operand.vmem [shape: f32[1,128], index: 3, kind: input, shape index: {}]
  %s4 = inlined_call_operand.hbm [shape: f32[2,16,16,128], index: 4, kind: output, shape index: {}]
  %s5 = sld [smem:[#allocation0]]
  $region49: #{tpu_custom_call.1} parent=0
    _
  %s7 = ssub.s32 1, %s5
  %s8 = scalar_select 0, %s7, %s5
  $region1: #{tpu_custom_call.1} parent=0
    #allocation3 [shape = 'u8[262144]{0}', space=vmem, size = 0x40000, scoped, tag = 'output window, operand 0']
    #allocation4 [shape = 's32[2]{0}', space=sflag, size = 0x8, scoped, tag = 'scoped memory for tpu_custom_call.1']
    %9 = vsyncpa [#allocation4], 0
    %s10 = scalar_lea.sflag [#allocation4], 1
    %11 = vsyncpa %s10, 0
    loop: start=0, step=1, limit=4
    $region2: #{tpu_custom_call.1} parent=1 // loop_pre_header
      _
    $region3: #{tpu_custom_call.1} parent=1 // loop_header
      %s13 = sphi 0, %s17
      %p14 = scmp.ge.s32.totalorder %s13, 4
      %s20 = sphi 0, %s39
      %s21 = sphi 0, %s35
      %s22 = sphi 0, %s31
      %s23 = sphi 0, %s20
      %s24 = sphi 0, %s21
      %s25 = sphi 0, %s22
      %s26 = sphi 0, %s23
      %s27 = sphi 0, %s24
      %s28 = sphi 0, %s25
      %s44 = sphi 0, %s46
      %s47 = sphi 0, %s44
      %s48 = sphi 0, %s47
      %s64 = sphi 0, %s48
      %s70 = sphi 0, %s72
      %s73 = sphi 0, %s70
      %s74 = sphi 0, %s73
      %s90 = sphi 0, %s74
      %s96 = sphi 0, %s98
      %s99 = sphi 0, %s96
      %s100 = sphi 0, %s99
      %s116 = sphi 0, %s100
      %s122 = sphi 0, %s124
      %s125 = sphi 0, %s122
      %s126 = sphi 0, %s125
      %s142 = sphi 0, %s126
      %s152 = sphi 0, %s154
      %s155 = sphi 0, %s152
      %s156 = sphi 0, %s155
      %s172 = sphi 0, %s156
    $region4: #{tpu_custom_call.1} parent=1 // loop_header_branch
      %16 = sbr.rel (%p14) target = $region8
    $region5: #{tpu_custom_call.1} parent=1 // loop_body
      %s18 = ssub.s32 %s13, 1
      %s19 = ssub.s32 %s13, 2
      %s29 = sadd.s32 1, %s22
      %p30 = scmp.ge.s32.totalorder %s29, 1
      %s31 = scalar_select %p30, 0, %s29
      %s32 = sadd.s32 1, %s21
      %s33 = scalar_select %p30, %s32, %s21
      %p34 = scmp.ge.s32.totalorder %s33, 1
      %s35 = scalar_select %p34, 0, %s33
      %s36 = sadd.s32 1, %s20
      %s37 = scalar_select %p34, %s36, %s20
      %p38 = scmp.ge.s32.totalorder %s37, 2
      %s39 = scalar_select %p38, 0, %s37
      %s40 = sadd.s32 %s20, %s21
      %s41 = sadd.s32 %s39, %s35
      %s42 = ssub.s32 %s40, %s41
      %p43 = scmp.eq.s32.totalorder %s42, 0
      %s45 = sadd.s32 %s44, 1
      %s46 = scalar_select %p43, %s44, %s45
      %p49 = pneg %p43
      %p50 = scmp.eq.s32.totalorder %s13, 1
      %p51 = por %p49, %p50
      %p52 = scmp.ne.s32.totalorder %s44, %s47
      %p53 = scmp.eq.s32.totalorder %s13, 0
      %p54 = por %p52, %p53
      %p55 = scmp.ne.s32.totalorder %s44, %s47
      %p56 = scmp.eq.s32.totalorder %s18, 1
      %p57 = por %p55, %p56
      %p58 = scmp.ne.s32.totalorder %s47, %s48
      %p59 = scmp.eq.s32.totalorder %s18, 0
      %p60 = por %p58, %p59
      %p61 = scmp.ne.s32.totalorder %s47, %s48
      %p62 = scmp.eq.s32.totalorder %s19, 1
      %p63 = por %p61, %p62
      %p65 = scmp.ne.s32.totalorder %s48, %s64
      %p66 = scmp.eq.s32.totalorder %s19, 0
      %p67 = por %p65, %p66
      %s68 = ssub.s32 %s22, %s31
      %p69 = scmp.eq.s32.totalorder %s68, 0
      %s71 = sadd.s32 %s70, 1
      %s72 = scalar_select %p69, %s70, %s71
      %p75 = pneg %p69
      %p76 = scmp.eq.s32.totalorder %s13, 1
      %p77 = por %p75, %p76
      %p78 = scmp.ne.s32.totalorder %s70, %s73
      %p79 = scmp.eq.s32.totalorder %s13, 0
      %p80 = por %p78, %p79
      %p81 = scmp.ne.s32.totalorder %s70, %s73
      %p82 = scmp.eq.s32.totalorder %s18, 1
      %p83 = por %p81, %p82
      %p84 = scmp.ne.s32.totalorder %s73, %s74
      %p85 = scmp.eq.s32.totalorder %s18, 0
      %p86 = por %p84, %p85
      %p87 = scmp.ne.s32.totalorder %s73, %s74
      %p88 = scmp.eq.s32.totalorder %s19, 1
      %p89 = por %p87, %p88
      %p91 = scmp.ne.s32.totalorder %s74, %s90
      %p92 = scmp.eq.s32.totalorder %s19, 0
      %p93 = por %p91, %p92
      %s94 = ssub.s32 %s22, %s31
      %p95 = scmp.eq.s32.totalorder %s94, 0
      %s97 = sadd.s32 %s96, 1
      %s98 = scalar_select %p95, %s96, %s97
      %p101 = pneg %p95
      %p102 = scmp.eq.s32.totalorder %s13, 1
      %p103 = por %p101, %p102
      %p104 = scmp.ne.s32.totalorder %s96, %s99
      %p105 = scmp.eq.s32.totalorder %s13, 0
      %p106 = por %p104, %p105
      %p107 = scmp.ne.s32.totalorder %s96, %s99
      %p108 = scmp.eq.s32.totalorder %s18, 1
      %p109 = por %p107, %p108
      %p110 = scmp.ne.s32.totalorder %s99, %s100
      %p111 = scmp.eq.s32.totalorder %s18, 0
      %p112 = por %p110, %p111
      %p113 = scmp.ne.s32.totalorder %s99, %s100
      %p114 = scmp.eq.s32.totalorder %s19, 1
      %p115 = por %p113, %p114
      %p117 = scmp.ne.s32.totalorder %s100, %s116
      %p118 = scmp.eq.s32.totalorder %s19, 0
      %p119 = por %p117, %p118
      %s120 = ssub.s32 %s22, %s31
      %p121 = scmp.eq.s32.totalorder %s120, 0
      %s123 = sadd.s32 %s122, 1
      %s124 = scalar_select %p121, %s122, %s123
      %p127 = pneg %p121
      %p128 = scmp.eq.s32.totalorder %s13, 1
      %p129 = por %p127, %p128
      %p130 = scmp.ne.s32.totalorder %s122, %s125
      %p131 = scmp.eq.s32.totalorder %s13, 0
      %p132 = por %p130, %p131
      %p133 = scmp.ne.s32.totalorder %s122, %s125
      %p134 = scmp.eq.s32.totalorder %s18, 1
      %p135 = por %p133, %p134
      %p136 = scmp.ne.s32.totalorder %s125, %s126
      %p137 = scmp.eq.s32.totalorder %s18, 0
      %p138 = por %p136, %p137
      %p139 = scmp.ne.s32.totalorder %s125, %s126
      %p140 = scmp.eq.s32.totalorder %s19, 1
      %p141 = por %p139, %p140
      %p143 = scmp.ne.s32.totalorder %s126, %s142
      %p144 = scmp.eq.s32.totalorder %s19, 0
      %p145 = por %p143, %p144
      %s146 = ssub.s32 %s20, %s39
      %s147 = ssub.s32 %s21, %s35
      %s148 = sor.u32 %s146, %s147
      %s149 = ssub.s32 %s22, %s31
      %s150 = sor.u32 %s148, %s149
      %p151 = scmp.eq.s32.totalorder %s150, 0
      %s153 = sadd.s32 %s152, 1
      %s154 = scalar_select %p151, %s152, %s153
      %p157 = pneg %p151
      %p158 = scmp.eq.s32.totalorder %s13, 1
      %p159 = por %p157, %p158
      %p160 = scmp.ne.s32.totalorder %s152, %s155
      %p161 = scmp.eq.s32.totalorder %s13, 0
      %p162 = por %p160, %p161
      %p163 = scmp.ne.s32.totalorder %s152, %s155
      %p164 = scmp.eq.s32.totalorder %s18, 1
      %p165 = por %p163, %p164
      %p166 = scmp.ne.s32.totalorder %s155, %s156
      %p167 = scmp.eq.s32.totalorder %s18, 0
      %p168 = por %p166, %p167
      %p169 = scmp.ne.s32.totalorder %s155, %s156
      %p170 = scmp.eq.s32.totalorder %s19, 1
      %p171 = por %p169, %p170
      %p173 = scmp.ne.s32.totalorder %s156, %s172
      %p174 = scmp.eq.s32.totalorder %s19, 0
      %p175 = por %p173, %p174
      %p176 = scmp.le.s32.totalorder 1, %s13
      %p177 = scmp.lt.s32.totalorder %s13, 3
      %p178 = pnand %p176, %p177
      %p179 = pneg %p178
      // Predicated region
      $region9: #{tpu_custom_call.1} parent=5 // pred_check
        _
      $region10: #{tpu_custom_call.1} parent=5 // pred_check_branch
        %181 = sbr.rel (%p178) target = $region12
      $region11: #{tpu_custom_call.1} parent=5 // pred_region
        %s182 = ssub.s32 %s13, 1
        // Predicated region
        $region13: #{tpu_custom_call.1} parent=11 // pred_check
          %p183 = pneg %p86
        $region14: #{tpu_custom_call.1} parent=11 // pred_check_branch
          %185 = sbr.rel (%p183) target = $region16
        $region15: #{tpu_custom_call.1} parent=11 // pred_region
          %p186 = scmp.lt.s32.totalorder %s25, 0
          %s187 = scalar_select %p186, %s25, 0
          %s188 = smul.addr %s187, 8
          %s189 = scalar_lea.vmem %s1, %s188
        $region16: #{tpu_custom_call.1} parent=11 // pred_fallthru
          _
        // Predicated region
        $region17: #{tpu_custom_call.1} parent=11 // pred_check
          %p190 = pneg %p112
        $region18: #{tpu_custom_call.1} parent=11 // pred_check_branch
          %192 = sbr.rel (%p190) target = $region20
        $region19: #{tpu_custom_call.1} parent=11 // pred_region
          %p193 = scmp.lt.s32.totalorder %s25, 0
          %s194 = scalar_select %p193, %s25, 0
          %s195 = scalar_lea.vmem %s2, %s194
        $region20: #{tpu_custom_call.1} parent=11 // pred_fallthru
          _
        // Predicated region
        $region21: #{tpu_custom_call.1} parent=11 // pred_check
          %p196 = pneg %p138
        $region22: #{tpu_custom_call.1} parent=11 // pred_check_branch
          %198 = sbr.rel (%p196) target = $region24
        $region23: #{tpu_custom_call.1} parent=11 // pred_region
          %p199 = scmp.lt.s32.totalorder %s25, 0
          %s200 = scalar_select %p199, %s25, 0
          %s201 = scalar_lea.vmem %s3, %s200
        $region24: #{tpu_custom_call.1} parent=11 // pred_fallthru
          _
      $region12: #{tpu_custom_call.1} parent=5 // pred_fallthru
        _
      %p202 = scmp.lt.s32.totalorder %s13, 2
      // Predicated region
      $region25: #{tpu_custom_call.1} parent=5 // pred_check
        %p203 = pneg %p202
      $region26: #{tpu_custom_call.1} parent=5 // pred_check_branch
        %205 = sbr.rel (%p203) target = $region28
      $region27: #{tpu_custom_call.1} parent=5 // pred_region
        // Predicated region
        $region29: #{tpu_custom_call.1} parent=27 // pred_check
          %p206 = pneg %p54
        $region30: #{tpu_custom_call.1} parent=27 // pred_check_branch
          %208 = sbr.rel (%p206) target = $region32
        $region31: #{tpu_custom_call.1} parent=27 // pred_region
          %s209 = sadd.s32 %s20, %s21
          %p210 = scmp.lt.s32.totalorder %s209, 1
          %s211 = scalar_select %p210, %s209, 1
          %s212 = smul.addr %s211, 54
          %s213 = smul.addr %s212, 8
          %s214 = scalar_lea.vmem %s0, %s213
          %s215 = sadd.s32 %s20, %s21
        $region32: #{tpu_custom_call.1} parent=27 // pred_fallthru
          _
      $region28: #{tpu_custom_call.1} parent=5 // pred_fallthru
        _
      %p216 = scmp.le.s32.totalorder 1, %s13
      %p217 = scmp.lt.s32.totalorder %s13, 3
      %p218 = pnand %p216, %p217
      %p219 = pneg %p218
      // Predicated region
      $region33: #{tpu_custom_call.1} parent=5 // pred_check
        _
      $region34: #{tpu_custom_call.1} parent=5 // pred_check_branch
        %221 = sbr.rel (%p218) target = $region36
      $region35: #{tpu_custom_call.1} parent=5 // pred_region
        %s222 = ssub.s32 %s13, 1
        %s223 = sadd.s32 %s23, %s24
        %p224 = scmp.lt.s32.totalorder %s223, 1
        %s225 = scalar_select %p224, %s223, 1
        %s226 = smul.addr %s225, 54
        %s227 = smul.addr %s226, 8
        %s228 = scalar_lea.vmem %s0, %s227
        %p229 = pneg %p60
        %p230 = pneg %p57
        %p231 = scmp.lt.s32.totalorder %s25, 0
        %s232 = scalar_select %p231, %s25, 0
        %s233 = smul.addr %s232, 8
        %s234 = scalar_lea.vmem %s1, %s233
        %p235 = pneg %p86
        %p236 = pneg %p83
        %p237 = scmp.lt.s32.totalorder %s25, 0
        %s238 = scalar_select %p237, %s25, 0
        %s239 = scalar_lea.vmem %s2, %s238
        %p240 = pneg %p112
        %p241 = pneg %p109
        %p242 = scmp.lt.s32.totalorder %s25, 0
        %s243 = scalar_select %p242, %s25, 0
        %s244 = scalar_lea.vmem %s3, %s243
        %p245 = pneg %p138
        %p246 = pneg %p135
        %p247 = pneg %p168
        %p248 = pneg %p165
        %s249 = sand.u32 %s155, 1
        %s250 = scalar_lea.sflag [#allocation4], %s249
        %s251 = sand.u32 %s155, 1
        %s252 = smul.addr %s251, 256
        %s253 = scalar_lea.vmem [#allocation3], %s252
        %s254 = sadd.s32 %s23, %s24
        %p255 = scmp.lt.s32.totalorder %s254, 1
        %s256 = scalar_select %p255, %s254, 1
        %s257 = smul.addr %s256, 54
        %s258 = smul.addr %s257, 8
        %s259 = scalar_lea.vmem %s0, %s258
        %s260 = sadd.s32 %s23, %s24
        %p261 = scmp.lt.s32.totalorder %s25, 0
        %s262 = scalar_select %p261, %s25, 0
        %s263 = smul.addr %s262, 8
        %s264 = scalar_lea.vmem %s1, %s263
        %p265 = scmp.lt.s32.totalorder %s25, 0
        %s266 = scalar_select %p265, %s25, 0
        %s267 = scalar_lea.vmem %s2, %s266
        %p268 = scmp.lt.s32.totalorder %s25, 0
        %s269 = scalar_select %p268, %s25, 0
        %s270 = scalar_lea.vmem %s3, %s269
        %s271 = smul.u32 16, %s24
        %v272 = vld [vmem:[%s259] sm:$0xff]
        %v273 = vld [vmem:[%s259 + $0x8] sm:$0xff]
        %v274 = vld [vmem:[%s259 + $0x18] sm:$0xff]
        %v275 = vld [vmem:[%s259 + $0x20] sm:$0xff]
        %v276 = vld [vmem:[%s259 + $0x30] sm:$0xff]
        %v277 = vld [vmem:[%s259 + $0x38] sm:$0xff]
        %v278 = vld [vmem:[%s259 + $0x48] sm:$0xff]
        %v279 = vld [vmem:[%s259 + $0x50] sm:$0xff]
        %v280 = vld [vmem:[%s259 + $0x60] sm:$0xff]
        %v281 = vld [vmem:[%s259 + $0x68] sm:$0xff]
        %v282 = vld [vmem:[%s259 + $0x78] sm:$0xff]
        %v283 = vld [vmem:[%s259 + $0x80] sm:$0xff]
        %v284 = vld [vmem:[%s259 + $0x90] sm:$0xff]
        %v285 = vld [vmem:[%s259 + $0x98] sm:$0xff]
        %v286 = vld [vmem:[%s259 + $0xa8] sm:$0xff]
        %v287 = vld [vmem:[%s259 + $0xb0] sm:$0xff]
        %v288 = vld [vmem:[%s259 + $0xc0] sm:$0xff]
        %v289 = vld [vmem:[%s259 + $0xc8] sm:$0xff]
        %v290 = vld [vmem:[%s259 + $0xd8] sm:$0xff]
        %v291 = vld [vmem:[%s259 + $0xe0] sm:$0xff]
        %v292 = vld [vmem:[%s259 + $0xf0] sm:$0xff]
        %v293 = vld [vmem:[%s259 + $0xf8] sm:$0xff]
        %v294 = vld [vmem:[%s259 + $0x108] sm:$0xff]
        %v295 = vld [vmem:[%s259 + $0x110] sm:$0xff]
        %v296 = vld [vmem:[%s259 + $0x120] sm:$0xff]
        %v297 = vld [vmem:[%s259 + $0x128] sm:$0xff]
        %v298 = vld [vmem:[%s259 + $0x138] sm:$0xff]
        %v299 = vld [vmem:[%s259 + $0x140] sm:$0xff]
        %v300 = vld [vmem:[%s259 + $0x150] sm:$0xff]
        %v301 = vld [vmem:[%s259 + $0x158] sm:$0xff]
        %v302 = vld [vmem:[%s259 + $0x168] sm:$0xff]
        %v303 = vld [vmem:[%s259 + $0x170] sm:$0xff]
        %vm304 = vcmask 31744
        %305 = vst.msk [vmem:[#allocation2] sm:$0xff] %vm304, %v272
        %306 = vst.msk [vmem:[#allocation2 + $0x8] sm:$0xff] %vm304, %v273
        %307 = vst.msk [vmem:[#allocation2 + $0x10] sm:$0xff] %vm304, %v274
        %308 = vst.msk [vmem:[#allocation2 + $0x18] sm:$0xff] %vm304, %v275
        %309 = vst.msk [vmem:[#allocation2 + $0x20] sm:$0xff] %vm304, %v276
        %310 = vst.msk [vmem:[#allocation2 + $0x28] sm:$0xff] %vm304, %v277
        %311 = vst.msk [vmem:[#allocation2 + $0x30] sm:$0xff] %vm304, %v278
        %312 = vst.msk [vmem:[#allocation2 + $0x38] sm:$0xff] %vm304, %v279
        %313 = vst.msk [vmem:[#allocation2 + $0x40] sm:$0xff] %vm304, %v280
        %314 = vst.msk [vmem:[#allocation2 + $0x48] sm:$0xff] %vm304, %v281
        %315 = vst.msk [vmem:[#allocation2 + $0x50] sm:$0xff] %vm304, %v282
        %316 = vst.msk [vmem:[#allocation2 + $0x58] sm:$0xff] %vm304, %v283
        %317 = vst.msk [vmem:[#allocation2 + $0x60] sm:$0xff] %vm304, %v284
        %318 = vst.msk [vmem:[#allocation2 + $0x68] sm:$0xff] %vm304, %v285
        %319 = vst.msk [vmem:[#allocation2 + $0x70] sm:$0xff] %vm304, %v286
        %320 = vst.msk [vmem:[#allocation2 + $0x78] sm:$0xff] %vm304, %v287
        %321 = vst.msk [vmem:[#allocation2 + $0x80] sm:$0xff] %vm304, %v288
        %322 = vst.msk [vmem:[#allocation2 + $0x88] sm:$0xff] %vm304, %v289
        %323 = vst.msk [vmem:[#allocation2 + $0x90] sm:$0xff] %vm304, %v290
        %324 = vst.msk [vmem:[#allocation2 + $0x98] sm:$0xff] %vm304, %v291
        %325 = vst.msk [vmem:[#allocation2 + $0xa0] sm:$0xff] %vm304, %v292
        %326 = vst.msk [vmem:[#allocation2 + $0xa8] sm:$0xff] %vm304, %v293
        %327 = vst.msk [vmem:[#allocation2 + $0xb0] sm:$0xff] %vm304, %v294
        %328 = vst.msk [vmem:[#allocation2 + $0xb8] sm:$0xff] %vm304, %v295
        %329 = vst.msk [vmem:[#allocation2 + $0xc0] sm:$0xff] %vm304, %v296
        %330 = vst.msk [vmem:[#allocation2 + $0xc8] sm:$0xff] %vm304, %v297
        %331 = vst.msk [vmem:[#allocation2 + $0xd0] sm:$0xff] %vm304, %v298
        %332 = vst.msk [vmem:[#allocation2 + $0xd8] sm:$0xff] %vm304, %v299
        %333 = vst.msk [vmem:[#allocation2 + $0xe0] sm:$0xff] %vm304, %v300
        %334 = vst.msk [vmem:[#allocation2 + $0xe8] sm:$0xff] %vm304, %v301
        %335 = vst.msk [vmem:[#allocation2 + $0xf0] sm:$0xff] %vm304, %v302
        %336 = vst.msk [vmem:[#allocation2 + $0xf8] sm:$0xff] %vm304, %v303
        %v337 = vld [vmem:[%s259 + $0x1] sm:$0xff]
        %v338 = vld [vmem:[%s259 + $0x9] sm:$0xff]
        %v339 = vld [vmem:[%s259 + $0x19] sm:$0xff]
        %v340 = vld [vmem:[%s259 + $0x21] sm:$0xff]
        %v341 = vld [vmem:[%s259 + $0x31] sm:$0xff]
        %v342 = vld [vmem:[%s259 + $0x39] sm:$0xff]
        %v343 = vld [vmem:[%s259 + $0x49] sm:$0xff]
        %v344 = vld [vmem:[%s259 + $0x51] sm:$0xff]
        %v345 = vld [vmem:[%s259 + $0x61] sm:$0xff]
        %v346 = vld [vmem:[%s259 + $0x69] sm:$0xff]
        %v347 = vld [vmem:[%s259 + $0x79] sm:$0xff]
        %v348 = vld [vmem:[%s259 + $0x81] sm:$0xff]
        %v349 = vld [vmem:[%s259 + $0x91] sm:$0xff]
        %v350 = vld [vmem:[%s259 + $0x99] sm:$0xff]
        %v351 = vld [vmem:[%s259 + $0xa9] sm:$0xff]
        %v352 = vld [vmem:[%s259 + $0xb1] sm:$0xff]
        %v353 = vld [vmem:[%s259 + $0xc1] sm:$0xff]
        %v354 = vld [vmem:[%s259 + $0xc9] sm:$0xff]
        %v355 = vld [vmem:[%s259 + $0xd9] sm:$0xff]
        %v356 = vld [vmem:[%s259 + $0xe1] sm:$0xff]
        %v357 = vld [vmem:[%s259 + $0xf1] sm:$0xff]
        %v358 = vld [vmem:[%s259 + $0xf9] sm:$0xff]
        %v359 = vld [vmem:[%s259 + $0x109] sm:$0xff]
        %v360 = vld [vmem:[%s259 + $0x111] sm:$0xff]
        %v361 = vld [vmem:[%s259 + $0x121] sm:$0xff]
        %v362 = vld [vmem:[%s259 + $0x129] sm:$0xff]
        %v363 = vld [vmem:[%s259 + $0x139] sm:$0xff]
        %v364 = vld [vmem:[%s259 + $0x141] sm:$0xff]
        %v365 = vld [vmem:[%s259 + $0x151] sm:$0xff]
        %v366 = vld [vmem:[%s259 + $0x159] sm:$0xff]
        %v367 = vld [vmem:[%s259 + $0x169] sm:$0xff]
        %v368 = vld [vmem:[%s259 + $0x171] sm:$0xff]
        %401 = vrot.lane.b32.xlu0 %v337, 4
        %v402 = vpop.permute.xlu0 %401
        %403 = vrot.lane.b32.xlu0 %v338, 4
        %v404 = vpop.permute.xlu0 %403
        %405 = vrot.lane.b32.xlu0 %v339, 4
        %v406 = vpop.permute.xlu0 %405
        %407 = vrot.lane.b32.xlu0 %v340, 4
        %v408 = vpop.permute.xlu0 %407
        %409 = vrot.lane.b32.xlu0 %v341, 4
        %v410 = vpop.permute.xlu0 %409
        %411 = vrot.lane.b32.xlu0 %v342, 4
        %v412 = vpop.permute.xlu0 %411
        %413 = vrot.lane.b32.xlu0 %v343, 4
        %v414 = vpop.permute.xlu0 %413
        %415 = vrot.lane.b32.xlu0 %v344, 4
        %v416 = vpop.permute.xlu0 %415
        %417 = vrot.lane.b32.xlu0 %v345, 4
        %v418 = vpop.permute.xlu0 %417
        %419 = vrot.lane.b32.xlu0 %v346, 4
        %v420 = vpop.permute.xlu0 %419
        %421 = vrot.lane.b32.xlu0 %v347, 4
        %v422 = vpop.permute.xlu0 %421
        %423 = vrot.lane.b32.xlu0 %v348, 4
        %v424 = vpop.permute.xlu0 %423
        %425 = vrot.lane.b32.xlu0 %v349, 4
        %v426 = vpop.permute.xlu0 %425
        %427 = vrot.lane.b32.xlu0 %v350, 4
        %v428 = vpop.permute.xlu0 %427
        %429 = vrot.lane.b32.xlu0 %v351, 4
        %v430 = vpop.permute.xlu0 %429
        %431 = vrot.lane.b32.xlu0 %v352, 4
        %v432 = vpop.permute.xlu0 %431
        %433 = vrot.lane.b32.xlu0 %v353, 4
        %v434 = vpop.permute.xlu0 %433
        %435 = vrot.lane.b32.xlu0 %v354, 4
        %v436 = vpop.permute.xlu0 %435
        %437 = vrot.lane.b32.xlu0 %v355, 4
        %v438 = vpop.permute.xlu0 %437
        %439 = vrot.lane.b32.xlu0 %v356, 4
        %v440 = vpop.permute.xlu0 %439
        %441 = vrot.lane.b32.xlu0 %v357, 4
        %v442 = vpop.permute.xlu0 %441
        %443 = vrot.lane.b32.xlu0 %v358, 4
        %v444 = vpop.permute.xlu0 %443
        %445 = vrot.lane.b32.xlu0 %v359, 4
        %v446 = vpop.permute.xlu0 %445
        %447 = vrot.lane.b32.xlu0 %v360, 4
        %v448 = vpop.permute.xlu0 %447
        %449 = vrot.lane.b32.xlu0 %v361, 4
        %v450 = vpop.permute.xlu0 %449
        %451 = vrot.lane.b32.xlu0 %v362, 4
        %v452 = vpop.permute.xlu0 %451
        %453 = vrot.lane.b32.xlu0 %v363, 4
        %v454 = vpop.permute.xlu0 %453
        %455 = vrot.lane.b32.xlu0 %v364, 4
        %v456 = vpop.permute.xlu0 %455
        %457 = vrot.lane.b32.xlu0 %v365, 4
        %v458 = vpop.permute.xlu0 %457
        %459 = vrot.lane.b32.xlu0 %v366, 4
        %v460 = vpop.permute.xlu0 %459
        %461 = vrot.lane.b32.xlu0 %v367, 4
        %v462 = vpop.permute.xlu0 %461
        %463 = vrot.lane.b32.xlu0 %v368, 4
        %v464 = vpop.permute.xlu0 %463
        %vm497 = vcmask 64544
        %498 = vst.msk [vmem:[#allocation2] sm:$0xff] %vm497, %v402
        %499 = vst.msk [vmem:[#allocation2 + $0x8] sm:$0xff] %vm497, %v404
        %500 = vst.msk [vmem:[#allocation2 + $0x10] sm:$0xff] %vm497, %v406
        %501 = vst.msk [vmem:[#allocation2 + $0x18] sm:$0xff] %vm497, %v408
        %502 = vst.msk [vmem:[#allocation2 + $0x20] sm:$0xff] %vm497, %v410
        %503 = vst.msk [vmem:[#allocation2 + $0x28] sm:$0xff] %vm497, %v412
        %504 = vst.msk [vmem:[#allocation2 + $0x30] sm:$0xff] %vm497, %v414
        %505 = vst.msk [vmem:[#allocation2 + $0x38] sm:$0xff] %vm497, %v416
        %506 = vst.msk [vmem:[#allocation2 + $0x40] sm:$0xff] %vm497, %v418
        %507 = vst.msk [vmem:[#allocation2 + $0x48] sm:$0xff] %vm497, %v420
        %508 = vst.msk [vmem:[#allocation2 + $0x50] sm:$0xff] %vm497, %v422
        %509 = vst.msk [vmem:[#allocation2 + $0x58] sm:$0xff] %vm497, %v424
        %510 = vst.msk [vmem:[#allocation2 + $0x60] sm:$0xff] %vm497, %v426
        %511 = vst.msk [vmem:[#allocation2 + $0x68] sm:$0xff] %vm497, %v428
        %512 = vst.msk [vmem:[#allocation2 + $0x70] sm:$0xff] %vm497, %v430
        %513 = vst.msk [vmem:[#allocation2 + $0x78] sm:$0xff] %vm497, %v432
        %514 = vst.msk [vmem:[#allocation2 + $0x80] sm:$0xff] %vm497, %v434
        %515 = vst.msk [vmem:[#allocation2 + $0x88] sm:$0xff] %vm497, %v436
        %516 = vst.msk [vmem:[#allocation2 + $0x90] sm:$0xff] %vm497, %v438
        %517 = vst.msk [vmem:[#allocation2 + $0x98] sm:$0xff] %vm497, %v440
        %518 = vst.msk [vmem:[#allocation2 + $0xa0] sm:$0xff] %vm497, %v442
        %519 = vst.msk [vmem:[#allocation2 + $0xa8] sm:$0xff] %vm497, %v444
        %520 = vst.msk [vmem:[#allocation2 + $0xb0] sm:$0xff] %vm497, %v446
        %521 = vst.msk [vmem:[#allocation2 + $0xb8] sm:$0xff] %vm497, %v448
        %522 = vst.msk [vmem:[#allocation2 + $0xc0] sm:$0xff] %vm497, %v450
        %523 = vst.msk [vmem:[#allocation2 + $0xc8] sm:$0xff] %vm497, %v452
        %524 = vst.msk [vmem:[#allocation2 + $0xd0] sm:$0xff] %vm497, %v454
        %525 = vst.msk [vmem:[#allocation2 + $0xd8] sm:$0xff] %vm497, %v456
        %526 = vst.msk [vmem:[#allocation2 + $0xe0] sm:$0xff] %vm497, %v458
        %527 = vst.msk [vmem:[#allocation2 + $0xe8] sm:$0xff] %vm497, %v460
        %528 = vst.msk [vmem:[#allocation2 + $0xf0] sm:$0xff] %vm497, %v462
        %529 = vst.msk [vmem:[#allocation2 + $0xf8] sm:$0xff] %vm497, %v464
        %v530 = vld [vmem:[%s259 + $0x2] sm:$0xff]
        %v531 = vld [vmem:[%s259 + $0xa] sm:$0xff]
        %v532 = vld [vmem:[%s259 + $0x1a] sm:$0xff]
        %v533 = vld [vmem:[%s259 + $0x22] sm:$0xff]
        %v534 = vld [vmem:[%s259 + $0x32] sm:$0xff]
        %v535 = vld [vmem:[%s259 + $0x3a] sm:$0xff]
        %v536 = vld [vmem:[%s259 + $0x4a] sm:$0xff]
        %v537 = vld [vmem:[%s259 + $0x52] sm:$0xff]
        %v538 = vld [vmem:[%s259 + $0x62] sm:$0xff]
        %v539 = vld [vmem:[%s259 + $0x6a] sm:$0xff]
        %v540 = vld [vmem:[%s259 + $0x7a] sm:$0xff]
        %v541 = vld [vmem:[%s259 + $0x82] sm:$0xff]
        %v542 = vld [vmem:[%s259 + $0x92] sm:$0xff]
        %v543 = vld [vmem:[%s259 + $0x9a] sm:$0xff]
        %v544 = vld [vmem:[%s259 + $0xaa] sm:$0xff]
        %v545 = vld [vmem:[%s259 + $0xb2] sm:$0xff]
        %v546 = vld [vmem:[%s259 + $0xc2] sm:$0xff]
        %v547 = vld [vmem:[%s259 + $0xca] sm:$0xff]
        %v548 = vld [vmem:[%s259 + $0xda] sm:$0xff]
        %v549 = vld [vmem:[%s259 + $0xe2] sm:$0xff]
        %v550 = vld [vmem:[%s259 + $0xf2] sm:$0xff]
        %v551 = vld [vmem:[%s259 + $0xfa] sm:$0xff]
        %v552 = vld [vmem:[%s259 + $0x10a] sm:$0xff]
        %v553 = vld [vmem:[%s259 + $0x112] sm:$0xff]
        %v554 = vld [vmem:[%s259 + $0x122] sm:$0xff]
        %v555 = vld [vmem:[%s259 + $0x12a] sm:$0xff]
        %v556 = vld [vmem:[%s259 + $0x13a] sm:$0xff]
        %v557 = vld [vmem:[%s259 + $0x142] sm:$0xff]
        %v558 = vld [vmem:[%s259 + $0x152] sm:$0xff]
        %v559 = vld [vmem:[%s259 + $0x15a] sm:$0xff]
        %v560 = vld [vmem:[%s259 + $0x16a] sm:$0xff]
        %v561 = vld [vmem:[%s259 + $0x172] sm:$0xff]
        %594 = vrot.lane.b32.xlu0 %v530, 8
        %v595 = vpop.permute.xlu0 %594
        %596 = vrot.lane.b32.xlu0 %v531, 8
        %v597 = vpop.permute.xlu0 %596
        %598 = vrot.lane.b32.xlu0 %v532, 8
        %v599 = vpop.permute.xlu0 %598
        %600 = vrot.lane.b32.xlu0 %v533, 8
        %v601 = vpop.permute.xlu0 %600
        %602 = vrot.lane.b32.xlu0 %v534, 8
        %v603 = vpop.permute.xlu0 %602
        %604 = vrot.lane.b32.xlu0 %v535, 8
        %v605 = vpop.permute.xlu0 %604
        %606 = vrot.lane.b32.xlu0 %v536, 8
        %v607 = vpop.permute.xlu0 %606
        %608 = vrot.lane.b32.xlu0 %v537, 8
        %v609 = vpop.permute.xlu0 %608
        %610 = vrot.lane.b32.xlu0 %v538, 8
        %v611 = vpop.permute.xlu0 %610
        %612 = vrot.lane.b32.xlu0 %v539, 8
        %v613 = vpop.permute.xlu0 %612
        %614 = vrot.lane.b32.xlu0 %v540, 8
        %v615 = vpop.permute.xlu0 %614
        %616 = vrot.lane.b32.xlu0 %v541, 8
        %v617 = vpop.permute.xlu0 %616
        %618 = vrot.lane.b32.xlu0 %v542, 8
        %v619 = vpop.permute.xlu0 %618
        %620 = vrot.lane.b32.xlu0 %v543, 8
        %v621 = vpop.permute.xlu0 %620
        %622 = vrot.lane.b32.xlu0 %v544, 8
        %v623 = vpop.permute.xlu0 %622
        %624 = vrot.lane.b32.xlu0 %v545, 8
        %v625 = vpop.permute.xlu0 %624
        %626 = vrot.lane.b32.xlu0 %v546, 8
        %v627 = vpop.permute.xlu0 %626
        %628 = vrot.lane.b32.xlu0 %v547, 8
        %v629 = vpop.permute.xlu0 %628
        %630 = vrot.lane.b32.xlu0 %v548, 8
        %v631 = vpop.permute.xlu0 %630
        %632 = vrot.lane.b32.xlu0 %v549, 8
        %v633 = vpop.permute.xlu0 %632
        %634 = vrot.lane.b32.xlu0 %v550, 8
        %v635 = vpop.permute.xlu0 %634
        %636 = vrot.lane.b32.xlu0 %v551, 8
        %v637 = vpop.permute.xlu0 %636
        %638 = vrot.lane.b32.xlu0 %v552, 8
        %v639 = vpop.permute.xlu0 %638
        %640 = vrot.lane.b32.xlu0 %v553, 8
        %v641 = vpop.permute.xlu0 %640
        %642 = vrot.lane.b32.xlu0 %v554, 8
        %v643 = vpop.permute.xlu0 %642
        %644 = vrot.lane.b32.xlu0 %v555, 8
        %v645 = vpop.permute.xlu0 %644
        %646 = vrot.lane.b32.xlu0 %v556, 8
        %v647 = vpop.permute.xlu0 %646
        %648 = vrot.lane.b32.xlu0 %v557, 8
        %v649 = vpop.permute.xlu0 %648
        %650 = vrot.lane.b32.xlu0 %v558, 8
        %v651 = vpop.permute.xlu0 %650
        %652 = vrot.lane.b32.xlu0 %v559, 8
        %v653 = vpop.permute.xlu0 %652
        %654 = vrot.lane.b32.xlu0 %v560, 8
        %v655 = vpop.permute.xlu0 %654
        %656 = vrot.lane.b32.xlu0 %v561, 8
        %v657 = vpop.permute.xlu0 %656
        %vm690 = vcmask 97344
        %691 = vst.msk [vmem:[#allocation2] sm:$0xff] %vm690, %v595
        %692 = vst.msk [vmem:[#allocation2 + $0x8] sm:$0xff] %vm690, %v597
        %693 = vst.msk [vmem:[#allocation2 + $0x10] sm:$0xff] %vm690, %v599
        %694 = vst.msk [vmem:[#allocation2 + $0x18] sm:$0xff] %vm690, %v601
        %695 = vst.msk [vmem:[#allocation2 + $0x20] sm:$0xff] %vm690, %v603
        %696 = vst.msk [vmem:[#allocation2 + $0x28] sm:$0xff] %vm690, %v605
        %697 = vst.msk [vmem:[#allocation2 + $0x30] sm:$0xff] %vm690, %v607
        %698 = vst.msk [vmem:[#allocation2 + $0x38] sm:$0xff] %vm690, %v609
        %699 = vst.msk [vmem:[#allocation2 + $0x40] sm:$0xff] %vm690, %v611
        %700 = vst.msk [vmem:[#allocation2 + $0x48] sm:$0xff] %vm690, %v613
        %701 = vst.msk [vmem:[#allocation2 + $0x50] sm:$0xff] %vm690, %v615
        %702 = vst.msk [vmem:[#allocation2 + $0x58] sm:$0xff] %vm690, %v617
        %703 = vst.msk [vmem:[#allocation2 + $0x60] sm:$0xff] %vm690, %v619
        %704 = vst.msk [vmem:[#allocation2 + $0x68] sm:$0xff] %vm690, %v621
        %705 = vst.msk [vmem:[#allocation2 + $0x70] sm:$0xff] %vm690, %v623
        %706 = vst.msk [vmem:[#allocation2 + $0x78] sm:$0xff] %vm690, %v625
        %707 = vst.msk [vmem:[#allocation2 + $0x80] sm:$0xff] %vm690, %v627
        %708 = vst.msk [vmem:[#allocation2 + $0x88] sm:$0xff] %vm690, %v629
        %709 = vst.msk [vmem:[#allocation2 + $0x90] sm:$0xff] %vm690, %v631
        %710 = vst.msk [vmem:[#allocation2 + $0x98] sm:$0xff] %vm690, %v633
        %711 = vst.msk [vmem:[#allocation2 + $0xa0] sm:$0xff] %vm690, %v635
        %712 = vst.msk [vmem:[#allocation2 + $0xa8] sm:$0xff] %vm690, %v637
        %713 = vst.msk [vmem:[#allocation2 + $0xb0] sm:$0xff] %vm690, %v639
        %714 = vst.msk [vmem:[#allocation2 + $0xb8] sm:$0xff] %vm690, %v641
        %715 = vst.msk [vmem:[#allocation2 + $0xc0] sm:$0xff] %vm690, %v643
        %716 = vst.msk [vmem:[#allocation2 + $0xc8] sm:$0xff] %vm690, %v645
        %717 = vst.msk [vmem:[#allocation2 + $0xd0] sm:$0xff] %vm690, %v647
        %718 = vst.msk [vmem:[#allocation2 + $0xd8] sm:$0xff] %vm690, %v649
        %719 = vst.msk [vmem:[#allocation2 + $0xe0] sm:$0xff] %vm690, %v651
        %720 = vst.msk [vmem:[#allocation2 + $0xe8] sm:$0xff] %vm690, %v653
        %721 = vst.msk [vmem:[#allocation2 + $0xf0] sm:$0xff] %vm690, %v655
        %722 = vst.msk [vmem:[#allocation2 + $0xf8] sm:$0xff] %vm690, %v657
        %s723 = scalar_lea.vmem %s259, 24
        %v724 = vld [vmem:[%s723] sm:$0xff]
        %v725 = vld [vmem:[%s723 + $0x8] sm:$0xff]
        %v726 = vld [vmem:[%s723 + $0x18] sm:$0xff]
        %v727 = vld [vmem:[%s723 + $0x20] sm:$0xff]
        %v728 = vld [vmem:[%s723 + $0x30] sm:$0xff]
        %v729 = vld [vmem:[%s723 + $0x38] sm:$0xff]
        %v730 = vld [vmem:[%s723 + $0x48] sm:$0xff]
        %v731 = vld [vmem:[%s723 + $0x50] sm:$0xff]
        %v732 = vld [vmem:[%s723 + $0x60] sm:$0xff]
        %v733 = vld [vmem:[%s723 + $0x68] sm:$0xff]
        %v734 = vld [vmem:[%s723 + $0x78] sm:$0xff]
        %v735 = vld [vmem:[%s723 + $0x80] sm:$0xff]
        %v736 = vld [vmem:[%s723 + $0x90] sm:$0xff]
        %v737 = vld [vmem:[%s723 + $0x98] sm:$0xff]
        %v738 = vld [vmem:[%s723 + $0xa8] sm:$0xff]
        %v739 = vld [vmem:[%s723 + $0xb0] sm:$0xff]
        %v740 = vld [vmem:[%s723 + $0xc0] sm:$0xff]
        %v741 = vld [vmem:[%s723 + $0xc8] sm:$0xff]
        %v742 = vld [vmem:[%s723 + $0xd8] sm:$0xff]
        %v743 = vld [vmem:[%s723 + $0xe0] sm:$0xff]
        %v744 = vld [vmem:[%s723 + $0xf0] sm:$0xff]
        %v745 = vld [vmem:[%s723 + $0xf8] sm:$0xff]
        %v746 = vld [vmem:[%s723 + $0x108] sm:$0xff]
        %v747 = vld [vmem:[%s723 + $0x110] sm:$0xff]
        %v748 = vld [vmem:[%s723 + $0x120] sm:$0xff]
        %v749 = vld [vmem:[%s723 + $0x128] sm:$0xff]
        %v750 = vld [vmem:[%s723 + $0x138] sm:$0xff]
        %v751 = vld [vmem:[%s723 + $0x140] sm:$0xff]
        %v752 = vld [vmem:[%s723 + $0x150] sm:$0xff]
        %v753 = vld [vmem:[%s723 + $0x158] sm:$0xff]
        %v754 = vld [vmem:[%s723 + $0x168] sm:$0xff]
        %v755 = vld [vmem:[%s723 + $0x170] sm:$0xff]
        %788 = vrot.lane.b32.xlu0 %v724, 12
        %v789 = vpop.permute.xlu0 %788
        %790 = vrot.lane.b32.xlu0 %v725, 12
        %v791 = vpop.permute.xlu0 %790
        %792 = vrot.lane.b32.xlu0 %v726, 12
        %v793 = vpop.permute.xlu0 %792
        %794 = vrot.lane.b32.xlu0 %v727, 12
        %v795 = vpop.permute.xlu0 %794
        %796 = vrot.lane.b32.xlu0 %v728, 12
        %v797 = vpop.permute.xlu0 %796
        %798 = vrot.lane.b32.xlu0 %v729, 12
        %v799 = vpop.permute.xlu0 %798
        %800 = vrot.lane.b32.xlu0 %v730, 12
        %v801 = vpop.permute.xlu0 %800
        %802 = vrot.lane.b32.xlu0 %v731, 12
        %v803 = vpop.permute.xlu0 %802
        %804 = vrot.lane.b32.xlu0 %v732, 12
        %v805 = vpop.permute.xlu0 %804
        %806 = vrot.lane.b32.xlu0 %v733, 12
        %v807 = vpop.permute.xlu0 %806
        %808 = vrot.lane.b32.xlu0 %v734, 12
        %v809 = vpop.permute.xlu0 %808
        %810 = vrot.lane.b32.xlu0 %v735, 12
        %v811 = vpop.permute.xlu0 %810
        %812 = vrot.lane.b32.xlu0 %v736, 12
        %v813 = vpop.permute.xlu0 %812
        %814 = vrot.lane.b32.xlu0 %v737, 12
        %v815 = vpop.permute.xlu0 %814
        %816 = vrot.lane.b32.xlu0 %v738, 12
        %v817 = vpop.permute.xlu0 %816
        %818 = vrot.lane.b32.xlu0 %v739, 12
        %v819 = vpop.permute.xlu0 %818
        %820 = vrot.lane.b32.xlu0 %v740, 12
        %v821 = vpop.permute.xlu0 %820
        %822 = vrot.lane.b32.xlu0 %v741, 12
        %v823 = vpop.permute.xlu0 %822
        %824 = vrot.lane.b32.xlu0 %v742, 12
        %v825 = vpop.permute.xlu0 %824
        %826 = vrot.lane.b32.xlu0 %v743, 12
        %v827 = vpop.permute.xlu0 %826
        %828 = vrot.lane.b32.xlu0 %v744, 12
        %v829 = vpop.permute.xlu0 %828
        %830 = vrot.lane.b32.xlu0 %v745, 12
        %v831 = vpop.permute.xlu0 %830
        %832 = vrot.lane.b32.xlu0 %v746, 12
        %v833 = vpop.permute.xlu0 %832
        %834 = vrot.lane.b32.xlu0 %v747, 12
        %v835 = vpop.permute.xlu0 %834
        %836 = vrot.lane.b32.xlu0 %v748, 12
        %v837 = vpop.permute.xlu0 %836
        %838 = vrot.lane.b32.xlu0 %v749, 12
        %v839 = vpop.permute.xlu0 %838
        %840 = vrot.lane.b32.xlu0 %v750, 12
        %v841 = vpop.permute.xlu0 %840
        %842 = vrot.lane.b32.xlu0 %v751, 12
        %v843 = vpop.permute.xlu0 %842
        %844 = vrot.lane.b32.xlu0 %v752, 12
        %v845 = vpop.permute.xlu0 %844
        %846 = vrot.lane.b32.xlu0 %v753, 12
        %v847 = vpop.permute.xlu0 %846
        %848 = vrot.lane.b32.xlu0 %v754, 12
        %v849 = vpop.permute.xlu0 %848
        %850 = vrot.lane.b32.xlu0 %v755, 12
        %v851 = vpop.permute.xlu0 %850
        %vm884 = vcmask 130144
        %885 = vst.msk [vmem:[#allocation2] sm:$0xff] %vm884, %v789
        %886 = vst.msk [vmem:[#allocation2 + $0x8] sm:$0xff] %vm884, %v791
        %887 = vst.msk [vmem:[#allocation2 + $0x10] sm:$0xff] %vm884, %v793
        %888 = vst.msk [vmem:[#allocation2 + $0x18] sm:$0xff] %vm884, %v795
        %889 = vst.msk [vmem:[#allocation2 + $0x20] sm:$0xff] %vm884, %v797
        %890 = vst.msk [vmem:[#allocation2 + $0x28] sm:$0xff] %vm884, %v799
        %891 = vst.msk [vmem:[#allocation2 + $0x30] sm:$0xff] %vm884, %v801
        %892 = vst.msk [vmem:[#allocation2 + $0x38] sm:$0xff] %vm884, %v803
        %893 = vst.msk [vmem:[#allocation2 + $0x40] sm:$0xff] %vm884, %v805
        %894 = vst.msk [vmem:[#allocation2 + $0x48] sm:$0xff] %vm884, %v807
        %895 = vst.msk [vmem:[#allocation2 + $0x50] sm:$0xff] %vm884, %v809
        %896 = vst.msk [vmem:[#allocation2 + $0x58] sm:$0xff] %vm884, %v811
        %897 = vst.msk [vmem:[#allocation2 + $0x60] sm:$0xff] %vm884, %v813
        %898 = vst.msk [vmem:[#allocation2 + $0x68] sm:$0xff] %vm884, %v815
        %899 = vst.msk [vmem:[#allocation2 + $0x70] sm:$0xff] %vm884, %v817
        %900 = vst.msk [vmem:[#allocation2 + $0x78] sm:$0xff] %vm884, %v819
        %901 = vst.msk [vmem:[#allocation2 + $0x80] sm:$0xff] %vm884, %v821
        %902 = vst.msk [vmem:[#allocation2 + $0x88] sm:$0xff] %vm884, %v823
        %903 = vst.msk [vmem:[#allocation2 + $0x90] sm:$0xff] %vm884, %v825
        %904 = vst.msk [vmem:[#allocation2 + $0x98] sm:$0xff] %vm884, %v827
        %905 = vst.msk [vmem:[#allocation2 + $0xa0] sm:$0xff] %vm884, %v829
        %906 = vst.msk [vmem:[#allocation2 + $0xa8] sm:$0xff] %vm884, %v831
        %907 = vst.msk [vmem:[#allocation2 + $0xb0] sm:$0xff] %vm884, %v833
        %908 = vst.msk [vmem:[#allocation2 + $0xb8] sm:$0xff] %vm884, %v835
        %909 = vst.msk [vmem:[#allocation2 + $0xc0] sm:$0xff] %vm884, %v837
        %910 = vst.msk [vmem:[#allocation2 + $0xc8] sm:$0xff] %vm884, %v839
        %911 = vst.msk [vmem:[#allocation2 + $0xd0] sm:$0xff] %vm884, %v841
        %912 = vst.msk [vmem:[#allocation2 + $0xd8] sm:$0xff] %vm884, %v843
        %913 = vst.msk [vmem:[#allocation2 + $0xe0] sm:$0xff] %vm884, %v845
        %914 = vst.msk [vmem:[#allocation2 + $0xe8] sm:$0xff] %vm884, %v847
        %915 = vst.msk [vmem:[#allocation2 + $0xf0] sm:$0xff] %vm884, %v849
        %916 = vst.msk [vmem:[#allocation2 + $0xf8] sm:$0xff] %vm884, %v851
        %v917 = vld [vmem:[%s723 + $0x1] sm:$0xff]
        %v918 = vld [vmem:[%s723 + $0x9] sm:$0xff]
        %v919 = vld [vmem:[%s723 + $0x19] sm:$0xff]
        %v920 = vld [vmem:[%s723 + $0x21] sm:$0xff]
        %v921 = vld [vmem:[%s723 + $0x31] sm:$0xff]
        %v922 = vld [vmem:[%s723 + $0x39] sm:$0xff]
        %v923 = vld [vmem:[%s723 + $0x49] sm:$0xff]
        %v924 = vld [vmem:[%s723 + $0x51] sm:$0xff]
        %v925 = vld [vmem:[%s723 + $0x61] sm:$0xff]
        %v926 = vld [vmem:[%s723 + $0x69] sm:$0xff]
        %v927 = vld [vmem:[%s723 + $0x79] sm:$0xff]
        %v928 = vld [vmem:[%s723 + $0x81] sm:$0xff]
        %v929 = vld [vmem:[%s723 + $0x91] sm:$0xff]
        %v930 = vld [vmem:[%s723 + $0x99] sm:$0xff]
        %v931 = vld [vmem:[%s723 + $0xa9] sm:$0xff]
        %v932 = vld [vmem:[%s723 + $0xb1] sm:$0xff]
        %v933 = vld [vmem:[%s723 + $0xc1] sm:$0xff]
        %v934 = vld [vmem:[%s723 + $0xc9] sm:$0xff]
        %v935 = vld [vmem:[%s723 + $0xd9] sm:$0xff]
        %v936 = vld [vmem:[%s723 + $0xe1] sm:$0xff]
        %v937 = vld [vmem:[%s723 + $0xf1] sm:$0xff]
        %v938 = vld [vmem:[%s723 + $0xf9] sm:$0xff]
        %v939 = vld [vmem:[%s723 + $0x109] sm:$0xff]
        %v940 = vld [vmem:[%s723 + $0x111] sm:$0xff]
        %v941 = vld [vmem:[%s723 + $0x121] sm:$0xff]
        %v942 = vld [vmem:[%s723 + $0x129] sm:$0xff]
        %v943 = vld [vmem:[%s723 + $0x139] sm:$0xff]
        %v944 = vld [vmem:[%s723 + $0x141] sm:$0xff]
        %v945 = vld [vmem:[%s723 + $0x151] sm:$0xff]
        %v946 = vld [vmem:[%s723 + $0x159] sm:$0xff]
        %v947 = vld [vmem:[%s723 + $0x169] sm:$0xff]
        %v948 = vld [vmem:[%s723 + $0x171] sm:$0xff]
        %981 = vrot.lane.b32.xlu0 %v917, 16
        %v982 = vpop.permute.xlu0 %981
        %983 = vrot.lane.b32.xlu0 %v918, 16
        %v984 = vpop.permute.xlu0 %983
        %985 = vrot.lane.b32.xlu0 %v919, 16
        %v986 = vpop.permute.xlu0 %985
        %987 = vrot.lane.b32.xlu0 %v920, 16
        %v988 = vpop.permute.xlu0 %987
        %989 = vrot.lane.b32.xlu0 %v921, 16
        %v990 = vpop.permute.xlu0 %989
        %991 = vrot.lane.b32.xlu0 %v922, 16
        %v992 = vpop.permute.xlu0 %991
        %993 = vrot.lane.b32.xlu0 %v923, 16
        %v994 = vpop.permute.xlu0 %993
        %995 = vrot.lane.b32.xlu0 %v924, 16
        %v996 = vpop.permute.xlu0 %995
        %997 = vrot.lane.b32.xlu0 %v925, 16
        %v998 = vpop.permute.xlu0 %997
        %999 = vrot.lane.b32.xlu0 %v926, 16
        %v1000 = vpop.permute.xlu0 %999
        %1001 = vrot.lane.b32.xlu0 %v927, 16
        %v1002 = vpop.permute.xlu0 %1001
        %1003 = vrot.lane.b32.xlu0 %v928, 16
        %v1004 = vpop.permute.xlu0 %1003
        %1005 = vrot.lane.b32.xlu0 %v929, 16
        %v1006 = vpop.permute.xlu0 %1005
        %1007 = vrot.lane.b32.xlu0 %v930, 16
        %v1008 = vpop.permute.xlu0 %1007
        %1009 = vrot.lane.b32.xlu0 %v931, 16
        %v1010 = vpop.permute.xlu0 %1009
        %1011 = vrot.lane.b32.xlu0 %v932, 16
        %v1012 = vpop.permute.xlu0 %1011
        %1013 = vrot.lane.b32.xlu0 %v933, 16
        %v1014 = vpop.permute.xlu0 %1013
        %1015 = vrot.lane.b32.xlu0 %v934, 16
        %v1016 = vpop.permute.xlu0 %1015
        %1017 = vrot.lane.b32.xlu0 %v935, 16
        %v1018 = vpop.permute.xlu0 %1017
        %1019 = vrot.lane.b32.xlu0 %v936, 16
        %v1020 = vpop.permute.xlu0 %1019
        %1021 = vrot.lane.b32.xlu0 %v937, 16
        %v1022 = vpop.permute.xlu0 %1021
        %1023 = vrot.lane.b32.xlu0 %v938, 16
        %v1024 = vpop.permute.xlu0 %1023
        %1025 = vrot.lane.b32.xlu0 %v939, 16
        %v1026 = vpop.permute.xlu0 %1025
        %1027 = vrot.lane.b32.xlu0 %v940, 16
        %v1028 = vpop.permute.xlu0 %1027
        %1029 = vrot.lane.b32.xlu0 %v941, 16
        %v1030 = vpop.permute.xlu0 %1029
        %1031 = vrot.lane.b32.xlu0 %v942, 16
        %v1032 = vpop.permute.xlu0 %1031
        %1033 = vrot.lane.b32.xlu0 %v943, 16
        %v1034 = vpop.permute.xlu0 %1033
        %1035 = vrot.lane.b32.xlu0 %v944, 16
        %v1036 = vpop.permute.xlu0 %1035
        %1037 = vrot.lane.b32.xlu0 %v945, 16
        %v1038 = vpop.permute.xlu0 %1037
        %1039 = vrot.lane.b32.xlu0 %v946, 16
        %v1040 = vpop.permute.xlu0 %1039
        %1041 = vrot.lane.b32.xlu0 %v947, 16
        %v1042 = vpop.permute.xlu0 %1041
        %1043 = vrot.lane.b32.xlu0 %v948, 16
        %v1044 = vpop.permute.xlu0 %1043
        %vm1077 = vcmask 162944
        %1078 = vst.msk [vmem:[#allocation2] sm:$0xff] %vm1077, %v982
        %1079 = vst.msk [vmem:[#allocation2 + $0x8] sm:$0xff] %vm1077, %v984
        %1080 = vst.msk [vmem:[#allocation2 + $0x10] sm:$0xff] %vm1077, %v986
        %1081 = vst.msk [vmem:[#allocation2 + $0x18] sm:$0xff] %vm1077, %v988
        %1082 = vst.msk [vmem:[#allocation2 + $0x20] sm:$0xff] %vm1077, %v990
        %1083 = vst.msk [vmem:[#allocation2 + $0x28] sm:$0xff] %vm1077, %v992
        %1084 = vst.msk [vmem:[#allocation2 + $0x30] sm:$0xff] %vm1077, %v994
        %1085 = vst.msk [vmem:[#allocation2 + $0x38] sm:$0xff] %vm1077, %v996
        %1086 = vst.msk [vmem:[#allocation2 + $0x40] sm:$0xff] %vm1077, %v998
        %1087 = vst.msk [vmem:[#allocation2 + $0x48] sm:$0xff] %vm1077, %v1000
        %1088 = vst.msk [vmem:[#allocation2 + $0x50] sm:$0xff] %vm1077, %v1002
        %1089 = vst.msk [vmem:[#allocation2 + $0x58] sm:$0xff] %vm1077, %v1004
        %1090 = vst.msk [vmem:[#allocation2 + $0x60] sm:$0xff] %vm1077, %v1006
        %1091 = vst.msk [vmem:[#allocation2 + $0x68] sm:$0xff] %vm1077, %v1008
        %1092 = vst.msk [vmem:[#allocation2 + $0x70] sm:$0xff] %vm1077, %v1010
        %1093 = vst.msk [vmem:[#allocation2 + $0x78] sm:$0xff] %vm1077, %v1012
        %1094 = vst.msk [vmem:[#allocation2 + $0x80] sm:$0xff] %vm1077, %v1014
        %1095 = vst.msk [vmem:[#allocation2 + $0x88] sm:$0xff] %vm1077, %v1016
        %1096 = vst.msk [vmem:[#allocation2 + $0x90] sm:$0xff] %vm1077, %v1018
        %1097 = vst.msk [vmem:[#allocation2 + $0x98] sm:$0xff] %vm1077, %v1020
        %1098 = vst.msk [vmem:[#allocation2 + $0xa0] sm:$0xff] %vm1077, %v1022
        %1099 = vst.msk [vmem:[#allocation2 + $0xa8] sm:$0xff] %vm1077, %v1024
        %1100 = vst.msk [vmem:[#allocation2 + $0xb0] sm:$0xff] %vm1077, %v1026
        %1101 = vst.msk [vmem:[#allocation2 + $0xb8] sm:$0xff] %vm1077, %v1028
        %1102 = vst.msk [vmem:[#allocation2 + $0xc0] sm:$0xff] %vm1077, %v1030
        %1103 = vst.msk [vmem:[#allocation2 + $0xc8] sm:$0xff] %vm1077, %v1032
        %1104 = vst.msk [vmem:[#allocation2 + $0xd0] sm:$0xff] %vm1077, %v1034
        %1105 = vst.msk [vmem:[#allocation2 + $0xd8] sm:$0xff] %vm1077, %v1036
        %1106 = vst.msk [vmem:[#allocation2 + $0xe0] sm:$0xff] %vm1077, %v1038
        %1107 = vst.msk [vmem:[#allocation2 + $0xe8] sm:$0xff] %vm1077, %v1040
        %1108 = vst.msk [vmem:[#allocation2 + $0xf0] sm:$0xff] %vm1077, %v1042
        %1109 = vst.msk [vmem:[#allocation2 + $0xf8] sm:$0xff] %vm1077, %v1044
        %v1110 = vld [vmem:[%s723 + $0x2] sm:$0xff]
        %v1111 = vld [vmem:[%s723 + $0xa] sm:$0xff]
        %v1112 = vld [vmem:[%s723 + $0x1a] sm:$0xff]
        %v1113 = vld [vmem:[%s723 + $0x22] sm:$0xff]
        %v1114 = vld [vmem:[%s723 + $0x32] sm:$0xff]
        %v1115 = vld [vmem:[%s723 + $0x3a] sm:$0xff]
        %v1116 = vld [vmem:[%s723 + $0x4a] sm:$0xff]
        %v1117 = vld [vmem:[%s723 + $0x52] sm:$0xff]
        %v1118 = vld [vmem:[%s723 + $0x62] sm:$0xff]
        %v1119 = vld [vmem:[%s723 + $0x6a] sm:$0xff]
        %v1120 = vld [vmem:[%s723 + $0x7a] sm:$0xff]
        %v1121 = vld [vmem:[%s723 + $0x82] sm:$0xff]
        %v1122 = vld [vmem:[%s723 + $0x92] sm:$0xff]
        %v1123 = vld [vmem:[%s723 + $0x9a] sm:$0xff]
        %v1124 = vld [vmem:[%s723 + $0xaa] sm:$0xff]
        %v1125 = vld [vmem:[%s723 + $0xb2] sm:$0xff]
        %v1126 = vld [vmem:[%s723 + $0xc2] sm:$0xff]
        %v1127 = vld [vmem:[%s723 + $0xca] sm:$0xff]
        %v1128 = vld [vmem:[%s723 + $0xda] sm:$0xff]
        %v1129 = vld [vmem:[%s723 + $0xe2] sm:$0xff]
        %v1130 = vld [vmem:[%s723 + $0xf2] sm:$0xff]
        %v1131 = vld [vmem:[%s723 + $0xfa] sm:$0xff]
        %v1132 = vld [vmem:[%s723 + $0x10a] sm:$0xff]
        %v1133 = vld [vmem:[%s723 + $0x112] sm:$0xff]
        %v1134 = vld [vmem:[%s723 + $0x122] sm:$0xff]
        %v1135 = vld [vmem:[%s723 + $0x12a] sm:$0xff]
        %v1136 = vld [vmem:[%s723 + $0x13a] sm:$0xff]
        %v1137 = vld [vmem:[%s723 + $0x142] sm:$0xff]
        %v1138 = vld [vmem:[%s723 + $0x152] sm:$0xff]
        %v1139 = vld [vmem:[%s723 + $0x15a] sm:$0xff]
        %v1140 = vld [vmem:[%s723 + $0x16a] sm:$0xff]
        %v1141 = vld [vmem:[%s723 + $0x172] sm:$0xff]
        %1174 = vrot.lane.b32.xlu0 %v1110, 20
        %v1175 = vpop.permute.xlu0 %1174
        %1176 = vrot.lane.b32.xlu0 %v1111, 20
        %v1177 = vpop.permute.xlu0 %1176
        %1178 = vrot.lane.b32.xlu0 %v1112, 20
        %v1179 = vpop.permute.xlu0 %1178
        %1180 = vrot.lane.b32.xlu0 %v1113, 20
        %v1181 = vpop.permute.xlu0 %1180
        %1182 = vrot.lane.b32.xlu0 %v1114, 20
        %v1183 = vpop.permute.xlu0 %1182
        %1184 = vrot.lane.b32.xlu0 %v1115, 20
        %v1185 = vpop.permute.xlu0 %1184
        %1186 = vrot.lane.b32.xlu0 %v1116, 20
        %v1187 = vpop.permute.xlu0 %1186
        %1188 = vrot.lane.b32.xlu0 %v1117, 20
        %v1189 = vpop.permute.xlu0 %1188
        %1190 = vrot.lane.b32.xlu0 %v1118, 20
        %v1191 = vpop.permute.xlu0 %1190
        %1192 = vrot.lane.b32.xlu0 %v1119, 20
        %v1193 = vpop.permute.xlu0 %1192
        %1194 = vrot.lane.b32.xlu0 %v1120, 20
        %v1195 = vpop.permute.xlu0 %1194
        %1196 = vrot.lane.b32.xlu0 %v1121, 20
        %v1197 = vpop.permute.xlu0 %1196
        %1198 = vrot.lane.b32.xlu0 %v1122, 20
        %v1199 = vpop.permute.xlu0 %1198
        %1200 = vrot.lane.b32.xlu0 %v1123, 20
        %v1201 = vpop.permute.xlu0 %1200
        %1202 = vrot.lane.b32.xlu0 %v1124, 20
        %v1203 = vpop.permute.xlu0 %1202
        %1204 = vrot.lane.b32.xlu0 %v1125, 20
        %v1205 = vpop.permute.xlu0 %1204
        %1206 = vrot.lane.b32.xlu0 %v1126, 20
        %v1207 = vpop.permute.xlu0 %1206
        %1208 = vrot.lane.b32.xlu0 %v1127, 20
        %v1209 = vpop.permute.xlu0 %1208
        %1210 = vrot.lane.b32.xlu0 %v1128, 20
        %v1211 = vpop.permute.xlu0 %1210
        %1212 = vrot.lane.b32.xlu0 %v1129, 20
        %v1213 = vpop.permute.xlu0 %1212
        %1214 = vrot.lane.b32.xlu0 %v1130, 20
        %v1215 = vpop.permute.xlu0 %1214
        %1216 = vrot.lane.b32.xlu0 %v1131, 20
        %v1217 = vpop.permute.xlu0 %1216
        %1218 = vrot.lane.b32.xlu0 %v1132, 20
        %v1219 = vpop.permute.xlu0 %1218
        %1220 = vrot.lane.b32.xlu0 %v1133, 20
        %v1221 = vpop.permute.xlu0 %1220
        %1222 = vrot.lane.b32.xlu0 %v1134, 20
        %v1223 = vpop.permute.xlu0 %1222
        %1224 = vrot.lane.b32.xlu0 %v1135, 20
        %v1225 = vpop.permute.xlu0 %1224
        %1226 = vrot.lane.b32.xlu0 %v1136, 20
        %v1227 = vpop.permute.xlu0 %1226
        %1228 = vrot.lane.b32.xlu0 %v1137, 20
        %v1229 = vpop.permute.xlu0 %1228
        %1230 = vrot.lane.b32.xlu0 %v1138, 20
        %v1231 = vpop.permute.xlu0 %1230
        %1232 = vrot.lane.b32.xlu0 %v1139, 20
        %v1233 = vpop.permute.xlu0 %1232
        %1234 = vrot.lane.b32.xlu0 %v1140, 20
        %v1235 = vpop.permute.xlu0 %1234
        %1236 = vrot.lane.b32.xlu0 %v1141, 20
        %v1237 = vpop.permute.xlu0 %1236
        %vm1270 = vcmask 195744
        %1271 = vst.msk [vmem:[#allocation2] sm:$0xff] %vm1270, %v1175
        %1272 = vst.msk [vmem:[#allocation2 + $0x8] sm:$0xff] %vm1270, %v1177
        %1273 = vst.msk [vmem:[#allocation2 + $0x10] sm:$0xff] %vm1270, %v1179
        %1274 = vst.msk [vmem:[#allocation2 + $0x18] sm:$0xff] %vm1270, %v1181
        %1275 = vst.msk [vmem:[#allocation2 + $0x20] sm:$0xff] %vm1270, %v1183
        %1276 = vst.msk [vmem:[#allocation2 + $0x28] sm:$0xff] %vm1270, %v1185
        %1277 = vst.msk [vmem:[#allocation2 + $0x30] sm:$0xff] %vm1270, %v1187
        %1278 = vst.msk [vmem:[#allocation2 + $0x38] sm:$0xff] %vm1270, %v1189
        %1279 = vst.msk [vmem:[#allocation2 + $0x40] sm:$0xff] %vm1270, %v1191
        %1280 = vst.msk [vmem:[#allocation2 + $0x48] sm:$0xff] %vm1270, %v1193
        %1281 = vst.msk [vmem:[#allocation2 + $0x50] sm:$0xff] %vm1270, %v1195
        %1282 = vst.msk [vmem:[#allocation2 + $0x58] sm:$0xff] %vm1270, %v1197
        %1283 = vst.msk [vmem:[#allocation2 + $0x60] sm:$0xff] %vm1270, %v1199
        %1284 = vst.msk [vmem:[#allocation2 + $0x68] sm:$0xff] %vm1270, %v1201
        %1285 = vst.msk [vmem:[#allocation2 + $0x70] sm:$0xff] %vm1270, %v1203
        %1286 = vst.msk [vmem:[#allocation2 + $0x78] sm:$0xff] %vm1270, %v1205
        %1287 = vst.msk [vmem:[#allocation2 + $0x80] sm:$0xff] %vm1270, %v1207
        %1288 = vst.msk [vmem:[#allocation2 + $0x88] sm:$0xff] %vm1270, %v1209
        %1289 = vst.msk [vmem:[#allocation2 + $0x90] sm:$0xff] %vm1270, %v1211
        %1290 = vst.msk [vmem:[#allocation2 + $0x98] sm:$0xff] %vm1270, %v1213
        %1291 = vst.msk [vmem:[#allocation2 + $0xa0] sm:$0xff] %vm1270, %v1215
        %1292 = vst.msk [vmem:[#allocation2 + $0xa8] sm:$0xff] %vm1270, %v1217
        %1293 = vst.msk [vmem:[#allocation2 + $0xb0] sm:$0xff] %vm1270, %v1219
        %1294 = vst.msk [vmem:[#allocation2 + $0xb8] sm:$0xff] %vm1270, %v1221
        %1295 = vst.msk [vmem:[#allocation2 + $0xc0] sm:$0xff] %vm1270, %v1223
        %1296 = vst.msk [vmem:[#allocation2 + $0xc8] sm:$0xff] %vm1270, %v1225
        %1297 = vst.msk [vmem:[#allocation2 + $0xd0] sm:$0xff] %vm1270, %v1227
        %1298 = vst.msk [vmem:[#allocation2 + $0xd8] sm:$0xff] %vm1270, %v1229
        %1299 = vst.msk [vmem:[#allocation2 + $0xe0] sm:$0xff] %vm1270, %v1231
        %1300 = vst.msk [vmem:[#allocation2 + $0xe8] sm:$0xff] %vm1270, %v1233
        %1301 = vst.msk [vmem:[#allocation2 + $0xf0] sm:$0xff] %vm1270, %v1235
        %1302 = vst.msk [vmem:[#allocation2 + $0xf8] sm:$0xff] %vm1270, %v1237
        %s1303 = scalar_lea.vmem %s259, 48
        %v1304 = vld [vmem:[%s1303] sm:$0xff]
        %v1305 = vld [vmem:[%s1303 + $0x8] sm:$0xff]
        %v1306 = vld [vmem:[%s1303 + $0x18] sm:$0xff]
        %v1307 = vld [vmem:[%s1303 + $0x20] sm:$0xff]
        %v1308 = vld [vmem:[%s1303 + $0x30] sm:$0xff]
        %v1309 = vld [vmem:[%s1303 + $0x38] sm:$0xff]
        %v1310 = vld [vmem:[%s1303 + $0x48] sm:$0xff]
        %v1311 = vld [vmem:[%s1303 + $0x50] sm:$0xff]
        %v1312 = vld [vmem:[%s1303 + $0x60] sm:$0xff]
        %v1313 = vld [vmem:[%s1303 + $0x68] sm:$0xff]
        %v1314 = vld [vmem:[%s1303 + $0x78] sm:$0xff]
        %v1315 = vld [vmem:[%s1303 + $0x80] sm:$0xff]
        %v1316 = vld [vmem:[%s1303 + $0x90] sm:$0xff]
        %v1317 = vld [vmem:[%s1303 + $0x98] sm:$0xff]
        %v1318 = vld [vmem:[%s1303 + $0xa8] sm:$0xff]
        %v1319 = vld [vmem:[%s1303 + $0xb0] sm:$0xff]
        %v1320 = vld [vmem:[%s1303 + $0xc0] sm:$0xff]
        %v1321 = vld [vmem:[%s1303 + $0xc8] sm:$0xff]
        %v1322 = vld [vmem:[%s1303 + $0xd8] sm:$0xff]
        %v1323 = vld [vmem:[%s1303 + $0xe0] sm:$0xff]
        %v1324 = vld [vmem:[%s1303 + $0xf0] sm:$0xff]
        %v1325 = vld [vmem:[%s1303 + $0xf8] sm:$0xff]
        %v1326 = vld [vmem:[%s1303 + $0x108] sm:$0xff]
        %v1327 = vld [vmem:[%s1303 + $0x110] sm:$0xff]
        %v1328 = vld [vmem:[%s1303 + $0x120] sm:$0xff]
        %v1329 = vld [vmem:[%s1303 + $0x128] sm:$0xff]
        %v1330 = vld [vmem:[%s1303 + $0x138] sm:$0xff]
        %v1331 = vld [vmem:[%s1303 + $0x140] sm:$0xff]
        %v1332 = vld [vmem:[%s1303 + $0x150] sm:$0xff]
        %v1333 = vld [vmem:[%s1303 + $0x158] sm:$0xff]
        %v1334 = vld [vmem:[%s1303 + $0x168] sm:$0xff]
        %v1335 = vld [vmem:[%s1303 + $0x170] sm:$0xff]
        %1368 = vrot.lane.b32.xlu0 %v1304, 24
        %v1369 = vpop.permute.xlu0 %1368
        %1370 = vrot.lane.b32.xlu0 %v1305, 24
        %v1371 = vpop.permute.xlu0 %1370
        %1372 = vrot.lane.b32.xlu0 %v1306, 24
        %v1373 = vpop.permute.xlu0 %1372
        %1374 = vrot.lane.b32.xlu0 %v1307, 24
        %v1375 = vpop.permute.xlu0 %1374
        %1376 = vrot.lane.b32.xlu0 %v1308, 24
        %v1377 = vpop.permute.xlu0 %1376
        %1378 = vrot.lane.b32.xlu0 %v1309, 24
        %v1379 = vpop.permute.xlu0 %1378
        %1380 = vrot.lane.b32.xlu0 %v1310, 24
        %v1381 = vpop.permute.xlu0 %1380
        %1382 = vrot.lane.b32.xlu0 %v1311, 24
        %v1383 = vpop.permute.xlu0 %1382
        %1384 = vrot.lane.b32.xlu0 %v1312, 24
        %v1385 = vpop.permute.xlu0 %1384
        %1386 = vrot.lane.b32.xlu0 %v1313, 24
        %v1387 = vpop.permute.xlu0 %1386
        %1388 = vrot.lane.b32.xlu0 %v1314, 24
        %v1389 = vpop.permute.xlu0 %1388
        %1390 = vrot.lane.b32.xlu0 %v1315, 24
        %v1391 = vpop.permute.xlu0 %1390
        %1392 = vrot.lane.b32.xlu0 %v1316, 24
        %v1393 = vpop.permute.xlu0 %1392
        %1394 = vrot.lane.b32.xlu0 %v1317, 24
        %v1395 = vpop.permute.xlu0 %1394
        %1396 = vrot.lane.b32.xlu0 %v1318, 24
        %v1397 = vpop.permute.xlu0 %1396
        %1398 = vrot.lane.b32.xlu0 %v1319, 24
        %v1399 = vpop.permute.xlu0 %1398
        %1400 = vrot.lane.b32.xlu0 %v1320, 24
        %v1401 = vpop.permute.xlu0 %1400
        %1402 = vrot.lane.b32.xlu0 %v1321, 24
        %v1403 = vpop.permute.xlu0 %1402
        %1404 = vrot.lane.b32.xlu0 %v1322, 24
        %v1405 = vpop.permute.xlu0 %1404
        %1406 = vrot.lane.b32.xlu0 %v1323, 24
        %v1407 = vpop.permute.xlu0 %1406
        %1408 = vrot.lane.b32.xlu0 %v1324, 24
        %v1409 = vpop.permute.xlu0 %1408
        %1410 = vrot.lane.b32.xlu0 %v1325, 24
        %v1411 = vpop.permute.xlu0 %1410
        %1412 = vrot.lane.b32.xlu0 %v1326, 24
        %v1413 = vpop.permute.xlu0 %1412
        %1414 = vrot.lane.b32.xlu0 %v1327, 24
        %v1415 = vpop.permute.xlu0 %1414
        %1416 = vrot.lane.b32.xlu0 %v1328, 24
        %v1417 = vpop.permute.xlu0 %1416
        %1418 = vrot.lane.b32.xlu0 %v1329, 24
        %v1419 = vpop.permute.xlu0 %1418
        %1420 = vrot.lane.b32.xlu0 %v1330, 24
        %v1421 = vpop.permute.xlu0 %1420
        %1422 = vrot.lane.b32.xlu0 %v1331, 24
        %v1423 = vpop.permute.xlu0 %1422
        %1424 = vrot.lane.b32.xlu0 %v1332, 24
        %v1425 = vpop.permute.xlu0 %1424
        %1426 = vrot.lane.b32.xlu0 %v1333, 24
        %v1427 = vpop.permute.xlu0 %1426
        %1428 = vrot.lane.b32.xlu0 %v1334, 24
        %v1429 = vpop.permute.xlu0 %1428
        %1430 = vrot.lane.b32.xlu0 %v1335, 24
        %v1431 = vpop.permute.xlu0 %1430
        %vm1464 = vcmask 228544
        %1465 = vst.msk [vmem:[#allocation2] sm:$0xff] %vm1464, %v1369
        %1466 = vst.msk [vmem:[#allocation2 + $0x8] sm:$0xff] %vm1464, %v1371
        %1467 = vst.msk [vmem:[#allocation2 + $0x10] sm:$0xff] %vm1464, %v1373
        %1468 = vst.msk [vmem:[#allocation2 + $0x18] sm:$0xff] %vm1464, %v1375
        %1469 = vst.msk [vmem:[#allocation2 + $0x20] sm:$0xff] %vm1464, %v1377
        %1470 = vst.msk [vmem:[#allocation2 + $0x28] sm:$0xff] %vm1464, %v1379
        %1471 = vst.msk [vmem:[#allocation2 + $0x30] sm:$0xff] %vm1464, %v1381
        %1472 = vst.msk [vmem:[#allocation2 + $0x38] sm:$0xff] %vm1464, %v1383
        %1473 = vst.msk [vmem:[#allocation2 + $0x40] sm:$0xff] %vm1464, %v1385
        %1474 = vst.msk [vmem:[#allocation2 + $0x48] sm:$0xff] %vm1464, %v1387
        %1475 = vst.msk [vmem:[#allocation2 + $0x50] sm:$0xff] %vm1464, %v1389
        %1476 = vst.msk [vmem:[#allocation2 + $0x58] sm:$0xff] %vm1464, %v1391
        %1477 = vst.msk [vmem:[#allocation2 + $0x60] sm:$0xff] %vm1464, %v1393
        %1478 = vst.msk [vmem:[#allocation2 + $0x68] sm:$0xff] %vm1464, %v1395
        %1479 = vst.msk [vmem:[#allocation2 + $0x70] sm:$0xff] %vm1464, %v1397
        %1480 = vst.msk [vmem:[#allocation2 + $0x78] sm:$0xff] %vm1464, %v1399
        %1481 = vst.msk [vmem:[#allocation2 + $0x80] sm:$0xff] %vm1464, %v1401
        %1482 = vst.msk [vmem:[#allocation2 + $0x88] sm:$0xff] %vm1464, %v1403
        %1483 = vst.msk [vmem:[#allocation2 + $0x90] sm:$0xff] %vm1464, %v1405
        %1484 = vst.msk [vmem:[#allocation2 + $0x98] sm:$0xff] %vm1464, %v1407
        %1485 = vst.msk [vmem:[#allocation2 + $0xa0] sm:$0xff] %vm1464, %v1409
        %1486 = vst.msk [vmem:[#allocation2 + $0xa8] sm:$0xff] %vm1464, %v1411
        %1487 = vst.msk [vmem:[#allocation2 + $0xb0] sm:$0xff] %vm1464, %v1413
        %1488 = vst.msk [vmem:[#allocation2 + $0xb8] sm:$0xff] %vm1464, %v1415
        %1489 = vst.msk [vmem:[#allocation2 + $0xc0] sm:$0xff] %vm1464, %v1417
        %1490 = vst.msk [vmem:[#allocation2 + $0xc8] sm:$0xff] %vm1464, %v1419
        %1491 = vst.msk [vmem:[#allocation2 + $0xd0] sm:$0xff] %vm1464, %v1421
        %1492 = vst.msk [vmem:[#allocation2 + $0xd8] sm:$0xff] %vm1464, %v1423
        %1493 = vst.msk [vmem:[#allocation2 + $0xe0] sm:$0xff] %vm1464, %v1425
        %1494 = vst.msk [vmem:[#allocation2 + $0xe8] sm:$0xff] %vm1464, %v1427
        %1495 = vst.msk [vmem:[#allocation2 + $0xf0] sm:$0xff] %vm1464, %v1429
        %1496 = vst.msk [vmem:[#allocation2 + $0xf8] sm:$0xff] %vm1464, %v1431
        %v1497 = vld [vmem:[%s1303 + $0x1] sm:$0xff]
        %v1498 = vld [vmem:[%s1303 + $0x9] sm:$0xff]
        %v1499 = vld [vmem:[%s1303 + $0x19] sm:$0xff]
        %v1500 = vld [vmem:[%s1303 + $0x21] sm:$0xff]
        %v1501 = vld [vmem:[%s1303 + $0x31] sm:$0xff]
        %v1502 = vld [vmem:[%s1303 + $0x39] sm:$0xff]
        %v1503 = vld [vmem:[%s1303 + $0x49] sm:$0xff]
        %v1504 = vld [vmem:[%s1303 + $0x51] sm:$0xff]
        %v1505 = vld [vmem:[%s1303 + $0x61] sm:$0xff]
        %v1506 = vld [vmem:[%s1303 + $0x69] sm:$0xff]
        %v1507 = vld [vmem:[%s1303 + $0x79] sm:$0xff]
        %v1508 = vld [vmem:[%s1303 + $0x81] sm:$0xff]
        %v1509 = vld [vmem:[%s1303 + $0x91] sm:$0xff]
        %v1510 = vld [vmem:[%s1303 + $0x99] sm:$0xff]
        %v1511 = vld [vmem:[%s1303 + $0xa9] sm:$0xff]
        %v1512 = vld [vmem:[%s1303 + $0xb1] sm:$0xff]
        %v1513 = vld [vmem:[%s1303 + $0xc1] sm:$0xff]
        %v1514 = vld [vmem:[%s1303 + $0xc9] sm:$0xff]
        %v1515 = vld [vmem:[%s1303 + $0xd9] sm:$0xff]
        %v1516 = vld [vmem:[%s1303 + $0xe1] sm:$0xff]
        %v1517 = vld [vmem:[%s1303 + $0xf1] sm:$0xff]
        %v1518 = vld [vmem:[%s1303 + $0xf9] sm:$0xff]
        %v1519 = vld [vmem:[%s1303 + $0x109] sm:$0xff]
        %v1520 = vld [vmem:[%s1303 + $0x111] sm:$0xff]
        %v1521 = vld [vmem:[%s1303 + $0x121] sm:$0xff]
        %v1522 = vld [vmem:[%s1303 + $0x129] sm:$0xff]
        %v1523 = vld [vmem:[%s1303 + $0x139] sm:$0xff]
        %v1524 = vld [vmem:[%s1303 + $0x141] sm:$0xff]
        %v1525 = vld [vmem:[%s1303 + $0x151] sm:$0xff]
        %v1526 = vld [vmem:[%s1303 + $0x159] sm:$0xff]
        %v1527 = vld [vmem:[%s1303 + $0x169] sm:$0xff]
        %v1528 = vld [vmem:[%s1303 + $0x171] sm:$0xff]
        %1561 = vrot.lane.b32.xlu0 %v1497, 28
        %v1562 = vpop.permute.xlu0 %1561
        %1563 = vrot.lane.b32.xlu0 %v1498, 28
        %v1564 = vpop.permute.xlu0 %1563
        %1565 = vrot.lane.b32.xlu0 %v1499, 28
        %v1566 = vpop.permute.xlu0 %1565
        %1567 = vrot.lane.b32.xlu0 %v1500, 28
        %v1568 = vpop.permute.xlu0 %1567
        %1569 = vrot.lane.b32.xlu0 %v1501, 28
        %v1570 = vpop.permute.xlu0 %1569
        %1571 = vrot.lane.b32.xlu0 %v1502, 28
        %v1572 = vpop.permute.xlu0 %1571
        %1573 = vrot.lane.b32.xlu0 %v1503, 28
        %v1574 = vpop.permute.xlu0 %1573
        %1575 = vrot.lane.b32.xlu0 %v1504, 28
        %v1576 = vpop.permute.xlu0 %1575
        %1577 = vrot.lane.b32.xlu0 %v1505, 28
        %v1578 = vpop.permute.xlu0 %1577
        %1579 = vrot.lane.b32.xlu0 %v1506, 28
        %v1580 = vpop.permute.xlu0 %1579
        %1581 = vrot.lane.b32.xlu0 %v1507, 28
        %v1582 = vpop.permute.xlu0 %1581
        %1583 = vrot.lane.b32.xlu0 %v1508, 28
        %v1584 = vpop.permute.xlu0 %1583
        %1585 = vrot.lane.b32.xlu0 %v1509, 28
        %v1586 = vpop.permute.xlu0 %1585
        %1587 = vrot.lane.b32.xlu0 %v1510, 28
        %v1588 = vpop.permute.xlu0 %1587
        %1589 = vrot.lane.b32.xlu0 %v1511, 28
        %v1590 = vpop.permute.xlu0 %1589
        %1591 = vrot.lane.b32.xlu0 %v1512, 28
        %v1592 = vpop.permute.xlu0 %1591
        %1593 = vrot.lane.b32.xlu0 %v1513, 28
        %v1594 = vpop.permute.xlu0 %1593
        %1595 = vrot.lane.b32.xlu0 %v1514, 28
        %v1596 = vpop.permute.xlu0 %1595
        %1597 = vrot.lane.b32.xlu0 %v1515, 28
        %v1598 = vpop.permute.xlu0 %1597
        %1599 = vrot.lane.b32.xlu0 %v1516, 28
        %v1600 = vpop.permute.xlu0 %1599
        %1601 = vrot.lane.b32.xlu0 %v1517, 28
        %v1602 = vpop.permute.xlu0 %1601
        %1603 = vrot.lane.b32.xlu0 %v1518, 28
        %v1604 = vpop.permute.xlu0 %1603
        %1605 = vrot.lane.b32.xlu0 %v1519, 28
        %v1606 = vpop.permute.xlu0 %1605
        %1607 = vrot.lane.b32.xlu0 %v1520, 28
        %v1608 = vpop.permute.xlu0 %1607
        %1609 = vrot.lane.b32.xlu0 %v1521, 28
        %v1610 = vpop.permute.xlu0 %1609
        %1611 = vrot.lane.b32.xlu0 %v1522, 28
        %v1612 = vpop.permute.xlu0 %1611
        %1613 = vrot.lane.b32.xlu0 %v1523, 28
        %v1614 = vpop.permute.xlu0 %1613
        %1615 = vrot.lane.b32.xlu0 %v1524, 28
        %v1616 = vpop.permute.xlu0 %1615
        %1617 = vrot.lane.b32.xlu0 %v1525, 28
        %v1618 = vpop.permute.xlu0 %1617
        %1619 = vrot.lane.b32.xlu0 %v1526, 28
        %v1620 = vpop.permute.xlu0 %1619
        %1621 = vrot.lane.b32.xlu0 %v1527, 28
        %v1622 = vpop.permute.xlu0 %1621
        %1623 = vrot.lane.b32.xlu0 %v1528, 28
        %v1624 = vpop.permute.xlu0 %1623
        %vm1657 = vcmask 261344
        %1658 = vst.msk [vmem:[#allocation2] sm:$0xff] %vm1657, %v1562
        %1659 = vst.msk [vmem:[#allocation2 + $0x8] sm:$0xff] %vm1657, %v1564
        %1660 = vst.msk [vmem:[#allocation2 + $0x10] sm:$0xff] %vm1657, %v1566
        %1661 = vst.msk [vmem:[#allocation2 + $0x18] sm:$0xff] %vm1657, %v1568
        %1662 = vst.msk [vmem:[#allocation2 + $0x20] sm:$0xff] %vm1657, %v1570
        %1663 = vst.msk [vmem:[#allocation2 + $0x28] sm:$0xff] %vm1657, %v1572
        %1664 = vst.msk [vmem:[#allocation2 + $0x30] sm:$0xff] %vm1657, %v1574
        %1665 = vst.msk [vmem:[#allocation2 + $0x38] sm:$0xff] %vm1657, %v1576
        %1666 = vst.msk [vmem:[#allocation2 + $0x40] sm:$0xff] %vm1657, %v1578
        %1667 = vst.msk [vmem:[#allocation2 + $0x48] sm:$0xff] %vm1657, %v1580
        %1668 = vst.msk [vmem:[#allocation2 + $0x50] sm:$0xff] %vm1657, %v1582
        %1669 = vst.msk [vmem:[#allocation2 + $0x58] sm:$0xff] %vm1657, %v1584
        %1670 = vst.msk [vmem:[#allocation2 + $0x60] sm:$0xff] %vm1657, %v1586
        %1671 = vst.msk [vmem:[#allocation2 + $0x68] sm:$0xff] %vm1657, %v1588
        %1672 = vst.msk [vmem:[#allocation2 + $0x70] sm:$0xff] %vm1657, %v1590
        %1673 = vst.msk [vmem:[#allocation2 + $0x78] sm:$0xff] %vm1657, %v1592
        %1674 = vst.msk [vmem:[#allocation2 + $0x80] sm:$0xff] %vm1657, %v1594
        %1675 = vst.msk [vmem:[#allocation2 + $0x88] sm:$0xff] %vm1657, %v1596
        %1676 = vst.msk [vmem:[#allocation2 + $0x90] sm:$0xff] %vm1657, %v1598
        %1677 = vst.msk [vmem:[#allocation2 + $0x98] sm:$0xff] %vm1657, %v1600
        %1678 = vst.msk [vmem:[#allocation2 + $0xa0] sm:$0xff] %vm1657, %v1602
        %1679 = vst.msk [vmem:[#allocation2 + $0xa8] sm:$0xff] %vm1657, %v1604
        %1680 = vst.msk [vmem:[#allocation2 + $0xb0] sm:$0xff] %vm1657, %v1606
        %1681 = vst.msk [vmem:[#allocation2 + $0xb8] sm:$0xff] %vm1657, %v1608
        %1682 = vst.msk [vmem:[#allocation2 + $0xc0] sm:$0xff] %vm1657, %v1610
        %1683 = vst.msk [vmem:[#allocation2 + $0xc8] sm:$0xff] %vm1657, %v1612
        %1684 = vst.msk [vmem:[#allocation2 + $0xd0] sm:$0xff] %vm1657, %v1614
        %1685 = vst.msk [vmem:[#allocation2 + $0xd8] sm:$0xff] %vm1657, %v1616
        %1686 = vst.msk [vmem:[#allocation2 + $0xe0] sm:$0xff] %vm1657, %v1618
        %1687 = vst.msk [vmem:[#allocation2 + $0xe8] sm:$0xff] %vm1657, %v1620
        %1688 = vst.msk [vmem:[#allocation2 + $0xf0] sm:$0xff] %vm1657, %v1622
        %1689 = vst.msk [vmem:[#allocation2 + $0xf8] sm:$0xff] %vm1657, %v1624
        %v1690 = vld [vmem:[%s1303 + $0x2] sm:$0xff]
        %v1691 = vld [vmem:[%s1303 + $0xa] sm:$0xff]
        %v1692 = vld [vmem:[%s1303 + $0x1a] sm:$0xff]
        %v1693 = vld [vmem:[%s1303 + $0x22] sm:$0xff]
        %v1694 = vld [vmem:[%s1303 + $0x32] sm:$0xff]
        %v1695 = vld [vmem:[%s1303 + $0x3a] sm:$0xff]
        %v1696 = vld [vmem:[%s1303 + $0x4a] sm:$0xff]
        %v1697 = vld [vmem:[%s1303 + $0x52] sm:$0xff]
        %v1698 = vld [vmem:[%s1303 + $0x62] sm:$0xff]
        %v1699 = vld [vmem:[%s1303 + $0x6a] sm:$0xff]
        %v1700 = vld [vmem:[%s1303 + $0x7a] sm:$0xff]
        %v1701 = vld [vmem:[%s1303 + $0x82] sm:$0xff]
        %v1702 = vld [vmem:[%s1303 + $0x92] sm:$0xff]
        %v1703 = vld [vmem:[%s1303 + $0x9a] sm:$0xff]
        %v1704 = vld [vmem:[%s1303 + $0xaa] sm:$0xff]
        %v1705 = vld [vmem:[%s1303 + $0xb2] sm:$0xff]
        %v1706 = vld [vmem:[%s1303 + $0xc2] sm:$0xff]
        %v1707 = vld [vmem:[%s1303 + $0xca] sm:$0xff]
        %v1708 = vld [vmem:[%s1303 + $0xda] sm:$0xff]
        %v1709 = vld [vmem:[%s1303 + $0xe2] sm:$0xff]
        %v1710 = vld [vmem:[%s1303 + $0xf2] sm:$0xff]
        %v1711 = vld [vmem:[%s1303 + $0xfa] sm:$0xff]
        %v1712 = vld [vmem:[%s1303 + $0x10a] sm:$0xff]
        %v1713 = vld [vmem:[%s1303 + $0x112] sm:$0xff]
        %v1714 = vld [vmem:[%s1303 + $0x122] sm:$0xff]
        %v1715 = vld [vmem:[%s1303 + $0x12a] sm:$0xff]
        %v1716 = vld [vmem:[%s1303 + $0x13a] sm:$0xff]
        %v1717 = vld [vmem:[%s1303 + $0x142] sm:$0xff]
        %v1718 = vld [vmem:[%s1303 + $0x152] sm:$0xff]
        %v1719 = vld [vmem:[%s1303 + $0x15a] sm:$0xff]
        %v1720 = vld [vmem:[%s1303 + $0x16a] sm:$0xff]
        %v1721 = vld [vmem:[%s1303 + $0x172] sm:$0xff]
        %1754 = vrot.lane.b32.xlu0 %v1690, 32
        %v1755 = vpop.permute.xlu0 %1754
        %1756 = vrot.lane.b32.xlu0 %v1691, 32
        %v1757 = vpop.permute.xlu0 %1756
        %1758 = vrot.lane.b32.xlu0 %v1692, 32
        %v1759 = vpop.permute.xlu0 %1758
        %1760 = vrot.lane.b32.xlu0 %v1693, 32
        %v1761 = vpop.permute.xlu0 %1760
        %1762 = vrot.lane.b32.xlu0 %v1694, 32
        %v1763 = vpop.permute.xlu0 %1762
        %1764 = vrot.lane.b32.xlu0 %v1695, 32
        %v1765 = vpop.permute.xlu0 %1764
        %1766 = vrot.lane.b32.xlu0 %v1696, 32
        %v1767 = vpop.permute.xlu0 %1766
        %1768 = vrot.lane.b32.xlu0 %v1697, 32
        %v1769 = vpop.permute.xlu0 %1768
        %1770 = vrot.lane.b32.xlu0 %v1698, 32
        %v1771 = vpop.permute.xlu0 %1770
        %1772 = vrot.lane.b32.xlu0 %v1699, 32
        %v1773 = vpop.permute.xlu0 %1772
        %1774 = vrot.lane.b32.xlu0 %v1700, 32
        %v1775 = vpop.permute.xlu0 %1774
        %1776 = vrot.lane.b32.xlu0 %v1701, 32
        %v1777 = vpop.permute.xlu0 %1776
        %1778 = vrot.lane.b32.xlu0 %v1702, 32
        %v1779 = vpop.permute.xlu0 %1778
        %1780 = vrot.lane.b32.xlu0 %v1703, 32
        %v1781 = vpop.permute.xlu0 %1780
        %1782 = vrot.lane.b32.xlu0 %v1704, 32
        %v1783 = vpop.permute.xlu0 %1782
        %1784 = vrot.lane.b32.xlu0 %v1705, 32
        %v1785 = vpop.permute.xlu0 %1784
        %1786 = vrot.lane.b32.xlu0 %v1706, 32
        %v1787 = vpop.permute.xlu0 %1786
        %1788 = vrot.lane.b32.xlu0 %v1707, 32
        %v1789 = vpop.permute.xlu0 %1788
        %1790 = vrot.lane.b32.xlu0 %v1708, 32
        %v1791 = vpop.permute.xlu0 %1790
        %1792 = vrot.lane.b32.xlu0 %v1709, 32
        %v1793 = vpop.permute.xlu0 %1792
        %1794 = vrot.lane.b32.xlu0 %v1710, 32
        %v1795 = vpop.permute.xlu0 %1794
        %1796 = vrot.lane.b32.xlu0 %v1711, 32
        %v1797 = vpop.permute.xlu0 %1796
        %1798 = vrot.lane.b32.xlu0 %v1712, 32
        %v1799 = vpop.permute.xlu0 %1798
        %1800 = vrot.lane.b32.xlu0 %v1713, 32
        %v1801 = vpop.permute.xlu0 %1800
        %1802 = vrot.lane.b32.xlu0 %v1714, 32
        %v1803 = vpop.permute.xlu0 %1802
        %1804 = vrot.lane.b32.xlu0 %v1715, 32
        %v1805 = vpop.permute.xlu0 %1804
        %1806 = vrot.lane.b32.xlu0 %v1716, 32
        %v1807 = vpop.permute.xlu0 %1806
        %1808 = vrot.lane.b32.xlu0 %v1717, 32
        %v1809 = vpop.permute.xlu0 %1808
        %1810 = vrot.lane.b32.xlu0 %v1718, 32
        %v1811 = vpop.permute.xlu0 %1810
        %1812 = vrot.lane.b32.xlu0 %v1719, 32
        %v1813 = vpop.permute.xlu0 %1812
        %1814 = vrot.lane.b32.xlu0 %v1720, 32
        %v1815 = vpop.permute.xlu0 %1814
        %1816 = vrot.lane.b32.xlu0 %v1721, 32
        %v1817 = vpop.permute.xlu0 %1816
        %vm1850 = vcmask 294144
        %1851 = vst.msk [vmem:[#allocation2] sm:$0xff] %vm1850, %v1755
        %1852 = vst.msk [vmem:[#allocation2 + $0x8] sm:$0xff] %vm1850, %v1757
        %1853 = vst.msk [vmem:[#allocation2 + $0x10] sm:$0xff] %vm1850, %v1759
        %1854 = vst.msk [vmem:[#allocation2 + $0x18] sm:$0xff] %vm1850, %v1761
        %1855 = vst.msk [vmem:[#allocation2 + $0x20] sm:$0xff] %vm1850, %v1763
        %1856 = vst.msk [vmem:[#allocation2 + $0x28] sm:$0xff] %vm1850, %v1765
        %1857 = vst.msk [vmem:[#allocation2 + $0x30] sm:$0xff] %vm1850, %v1767
        %1858 = vst.msk [vmem:[#allocation2 + $0x38] sm:$0xff] %vm1850, %v1769
        %1859 = vst.msk [vmem:[#allocation2 + $0x40] sm:$0xff] %vm1850, %v1771
        %1860 = vst.msk [vmem:[#allocation2 + $0x48] sm:$0xff] %vm1850, %v1773
        %1861 = vst.msk [vmem:[#allocation2 + $0x50] sm:$0xff] %vm1850, %v1775
        %1862 = vst.msk [vmem:[#allocation2 + $0x58] sm:$0xff] %vm1850, %v1777
        %1863 = vst.msk [vmem:[#allocation2 + $0x60] sm:$0xff] %vm1850, %v1779
        %1864 = vst.msk [vmem:[#allocation2 + $0x68] sm:$0xff] %vm1850, %v1781
        %1865 = vst.msk [vmem:[#allocation2 + $0x70] sm:$0xff] %vm1850, %v1783
        %1866 = vst.msk [vmem:[#allocation2 + $0x78] sm:$0xff] %vm1850, %v1785
        %1867 = vst.msk [vmem:[#allocation2 + $0x80] sm:$0xff] %vm1850, %v1787
        %1868 = vst.msk [vmem:[#allocation2 + $0x88] sm:$0xff] %vm1850, %v1789
        %1869 = vst.msk [vmem:[#allocation2 + $0x90] sm:$0xff] %vm1850, %v1791
        %1870 = vst.msk [vmem:[#allocation2 + $0x98] sm:$0xff] %vm1850, %v1793
        %1871 = vst.msk [vmem:[#allocation2 + $0xa0] sm:$0xff] %vm1850, %v1795
        %1872 = vst.msk [vmem:[#allocation2 + $0xa8] sm:$0xff] %vm1850, %v1797
        %1873 = vst.msk [vmem:[#allocation2 + $0xb0] sm:$0xff] %vm1850, %v1799
        %1874 = vst.msk [vmem:[#allocation2 + $0xb8] sm:$0xff] %vm1850, %v1801
        %1875 = vst.msk [vmem:[#allocation2 + $0xc0] sm:$0xff] %vm1850, %v1803
        %1876 = vst.msk [vmem:[#allocation2 + $0xc8] sm:$0xff] %vm1850, %v1805
        %1877 = vst.msk [vmem:[#allocation2 + $0xd0] sm:$0xff] %vm1850, %v1807
        %1878 = vst.msk [vmem:[#allocation2 + $0xd8] sm:$0xff] %vm1850, %v1809
        %1879 = vst.msk [vmem:[#allocation2 + $0xe0] sm:$0xff] %vm1850, %v1811
        %1880 = vst.msk [vmem:[#allocation2 + $0xe8] sm:$0xff] %vm1850, %v1813
        %1881 = vst.msk [vmem:[#allocation2 + $0xf0] sm:$0xff] %vm1850, %v1815
        %1882 = vst.msk [vmem:[#allocation2 + $0xf8] sm:$0xff] %vm1850, %v1817
        %v1883 = vld [vmem:[#allocation2] sm:$0xff]
        %v1884 = vld [vmem:[#allocation2 + $0x8] sm:$0xff]
        %v1885 = vld [vmem:[#allocation2 + $0x10] sm:$0xff]
        %v1886 = vld [vmem:[#allocation2 + $0x18] sm:$0xff]
        %v1887 = vld [vmem:[#allocation2 + $0x20] sm:$0xff]
        %v1888 = vld [vmem:[#allocation2 + $0x28] sm:$0xff]
        %v1889 = vld [vmem:[#allocation2 + $0x30] sm:$0xff]
        %v1890 = vld [vmem:[#allocation2 + $0x38] sm:$0xff]
        %v1891 = vld [vmem:[#allocation2 + $0x40] sm:$0xff]
        %v1892 = vld [vmem:[#allocation2 + $0x48] sm:$0xff]
        %v1893 = vld [vmem:[#allocation2 + $0x50] sm:$0xff]
        %v1894 = vld [vmem:[#allocation2 + $0x58] sm:$0xff]
        %v1895 = vld [vmem:[#allocation2 + $0x60] sm:$0xff]
        %v1896 = vld [vmem:[#allocation2 + $0x68] sm:$0xff]
        %v1897 = vld [vmem:[#allocation2 + $0x70] sm:$0xff]
        %v1898 = vld [vmem:[#allocation2 + $0x78] sm:$0xff]
        %v1899 = vld [vmem:[#allocation2 + $0x80] sm:$0xff]
        %v1900 = vld [vmem:[#allocation2 + $0x88] sm:$0xff]
        %v1901 = vld [vmem:[#allocation2 + $0x90] sm:$0xff]
        %v1902 = vld [vmem:[#allocation2 + $0x98] sm:$0xff]
        %v1903 = vld [vmem:[#allocation2 + $0xa0] sm:$0xff]
        %v1904 = vld [vmem:[#allocation2 + $0xa8] sm:$0xff]
        %v1905 = vld [vmem:[#allocation2 + $0xb0] sm:$0xff]
        %v1906 = vld [vmem:[#allocation2 + $0xb8] sm:$0xff]
        %v1907 = vld [vmem:[#allocation2 + $0xc0] sm:$0xff]
        %v1908 = vld [vmem:[#allocation2 + $0xc8] sm:$0xff]
        %v1909 = vld [vmem:[#allocation2 + $0xd0] sm:$0xff]
        %v1910 = vld [vmem:[#allocation2 + $0xd8] sm:$0xff]
        %v1911 = vld [vmem:[#allocation2 + $0xe0] sm:$0xff]
        %v1912 = vld [vmem:[#allocation2 + $0xe8] sm:$0xff]
        %v1913 = vld [vmem:[#allocation2 + $0xf0] sm:$0xff]
        %v1914 = vld [vmem:[#allocation2 + $0xf8] sm:$0xff]
        %v1915 = vld [vmem:[%s264] sm:$0xff]
        %v1916 = vld [vmem:[%s264 + $0x8] sm:$0xff]
        %v1917 = vld [vmem:[%s264 + $0x10] sm:$0xff]
        %v1918 = vld [vmem:[%s264 + $0x18] sm:$0xff]
        %v1919 = vld [vmem:[%s264 + $0x20] sm:$0xf]
        %vm1920 = vcmask 293888
        %v1922 = vsel %vm1920, %v1883, 0
        %v1925 = vsel %vm1920, %v1884, 0
        %v1928 = vsel %vm1920, %v1885, 0
        %v1931 = vsel %vm1920, %v1886, 0
        %v1934 = vsel %vm1920, %v1887, 0
        %v1937 = vsel %vm1920, %v1888, 0
        %v1940 = vsel %vm1920, %v1889, 0
        %v1943 = vsel %vm1920, %v1890, 0
        %v1946 = vsel %vm1920, %v1891, 0
        %v1949 = vsel %vm1920, %v1892, 0
        %v1952 = vsel %vm1920, %v1893, 0
        %v1955 = vsel %vm1920, %v1894, 0
        %v1958 = vsel %vm1920, %v1895, 0
        %v1961 = vsel %vm1920, %v1896, 0
        %v1964 = vsel %vm1920, %v1897, 0
        %v1967 = vsel %vm1920, %v1898, 0
        %v1970 = vsel %vm1920, %v1899, 0
        %v1973 = vsel %vm1920, %v1900, 0
        %v1976 = vsel %vm1920, %v1901, 0
        %v1979 = vsel %vm1920, %v1902, 0
        %v1982 = vsel %vm1920, %v1903, 0
        %v1985 = vsel %vm1920, %v1904, 0
        %v1988 = vsel %vm1920, %v1905, 0
        %v1991 = vsel %vm1920, %v1906, 0
        %v1994 = vsel %vm1920, %v1907, 0
        %v1997 = vsel %vm1920, %v1908, 0
        %v2000 = vsel %vm1920, %v1909, 0
        %v2003 = vsel %vm1920, %v1910, 0
        %v2006 = vsel %vm1920, %v1911, 0
        %v2009 = vsel %vm1920, %v1912, 0
        %v2012 = vsel %vm1920, %v1913, 0
        %v2015 = vsel %vm1920, %v1914, 0
        %vm2017 = vcmask 1043456
        %v2019 = vsel %vm2017, %v1919, 0
        %2021 = vmatprep.subr.mxu0 0.0
        %2022 = vmatpush1.msra.mxu0 %v1915
        %2023 = vmatprep.subr.mxu0 0.0
        %2024 = vmatpush1.msra.mxu0 %v1916
        %2025 = vmatprep.subr.mxu0 0.0
        %2026 = vmatpush1.msra.mxu0 %v1917
        %2027 = vmatprep.subr.mxu0 0.0
        %2028 = vmatpush1.msra.mxu0 %v1918
        %2029 = vmatprep.subr.mxu0 0.0
        %2030 = vmatpush1.msra.mxu0 %v2019
        %2031 = vmatprep.subr.mxu0 0.0
        %2032 = vmatpush1.msra.mxu0 0.0
        %2033 = vmatprep.subr.mxu0 0.0
        %2034 = vmatpush1.msra.mxu0 0.0
        %2035 = vmatprep.subr.mxu0 0.0
        %2036 = vmatpush1.msra.mxu0 0.0
        %2037 = vmatprep.subr.mxu0 0.0
        %2038 = vmatpush1.msra.mxu0 0.0
        %2039 = vmatprep.subr.mxu0 0.0
        %2040 = vmatpush1.msra.mxu0 0.0
        %2041 = vmatprep.subr.mxu0 0.0
        %2042 = vmatpush1.msra.mxu0 0.0
        %2043 = vmatprep.subr.mxu0 0.0
        %2044 = vmatpush1.msra.mxu0 0.0
        %2045 = vmatprep.subr.mxu0 0.0
        %2046 = vmatpush1.msra.mxu0 0.0
        %2047 = vmatprep.subr.mxu0 0.0
        %2048 = vmatpush1.msra.mxu0 0.0
        %2049 = vmatprep.subr.mxu0 0.0
        %2050 = vmatpush1.msra.mxu0 0.0
        %2051 = vmatprep.subr.mxu0 0.0
        %2052 = vmatpush1.msra.mxu0 0.0
        %2053 = vmatprep.subr.mxu0 0.0
        %2054 = vmatpush1.msra.mxu0 0.0
        %2055 = vmatprep.subr.mxu0 0.0
        %2056 = vmatpush1.msra.mxu0 0.0
        %2057 = vmatprep.subr.mxu0 0.0
        %2058 = vmatpush1.msra.mxu0 0.0
        %2059 = vmatprep.subr.mxu0 0.0
        %2060 = vmatpush1.msra.mxu0 0.0
        %2061 = vmatprep.subr.mxu0 0.0
        %2062 = vmatpush1.msra.mxu0 0.0
        %2063 = vmatprep.subr.mxu0 0.0
        %2064 = vmatpush1.msra.mxu0 0.0
        %2065 = vmatprep.subr.mxu0 0.0
        %2066 = vmatpush1.msra.mxu0 0.0
        %2067 = vmatprep.subr.mxu0 0.0
        %2068 = vmatpush1.msra.mxu0 0.0
        %2069 = vmatprep.subr.mxu0 0.0
        %2070 = vmatpush1.msra.mxu0 0.0
        %2071 = vmatprep.subr.mxu0 0.0
        %2072 = vmatpush1.msra.mxu0 0.0
        %2073 = vmatprep.subr.mxu0 0.0
        %2074 = vmatpush1.msra.mxu0 0.0
        %2075 = vmatprep.subr.mxu0 0.0
        %2076 = vmatpush1.msra.mxu0 0.0
        %2077 = vmatprep.subr.mxu0 0.0
        %2078 = vmatpush1.msra.mxu0 0.0
        %2079 = vmatprep.subr.mxu0 0.0
        %2080 = vmatpush1.msra.mxu0 0.0
        %2081 = vmatprep.subr.mxu0 0.0
        %2082 = vmatpush1.msra.mxu0 0.0
        %2083 = vmatprep.subr.mxu0 0.0
        %2084 = vmatpush1.msra.mxu0 0.0
        %2085 = vmatprep.mubr.f32.mxu0 0.0
        %2086 = vmatmul.mubr.f32.gmra.mrb[0].mxu0 %v1922
        %v2087 = vpop.f32.mrb[0].mxu0
        %v2088 = vadd.f32 0.0, %v2087
        %v2089 = vpop.f32.mrb[0].mxu0
        %2090 = vmatprep.mubr.f32.mxu0 0.0
        %2091 = vmatmul.mubr.f32.gmra.mrb[0].mxu0 %v1925
        %v2092 = vpop.f32.mrb[0].mxu0
        %v2093 = vadd.f32 0.0, %v2092
        %v2094 = vpop.f32.mrb[0].mxu0
        %2095 = vmatprep.mubr.f32.mxu0 0.0
        %2096 = vmatmul.mubr.f32.gmra.mrb[0].mxu0 %v1928
        %v2097 = vpop.f32.mrb[0].mxu0
        %v2098 = vadd.f32 0.0, %v2097
        %v2099 = vpop.f32.mrb[0].mxu0
        %2100 = vmatprep.mubr.f32.mxu0 0.0
        %2101 = vmatmul.mubr.f32.gmra.mrb[0].mxu0 %v1931
        %v2102 = vpop.f32.mrb[0].mxu0
        %v2103 = vadd.f32 0.0, %v2102
        %v2104 = vpop.f32.mrb[0].mxu0
        %2105 = vmatprep.mubr.f32.mxu0 0.0
        %2106 = vmatmul.mubr.f32.gmra.mrb[0].mxu0 %v1934
        %v2107 = vpop.f32.mrb[0].mxu0
        %v2108 = vadd.f32 0.0, %v2107
        %v2109 = vpop.f32.mrb[0].mxu0
        %2110 = vmatprep.mubr.f32.mxu0 0.0
        %2111 = vmatmul.mubr.f32.gmra.mrb[0].mxu0 %v1937
        %v2112 = vpop.f32.mrb[0].mxu0
        %v2113 = vadd.f32 0.0, %v2112
        %v2114 = vpop.f32.mrb[0].mxu0
        %2115 = vmatprep.mubr.f32.mxu0 0.0
        %2116 = vmatmul.mubr.f32.gmra.mrb[0].mxu0 %v1940
        %v2117 = vpop.f32.mrb[0].mxu0
        %v2118 = vadd.f32 0.0, %v2117
        %v2119 = vpop.f32.mrb[0].mxu0
        %2120 = vmatprep.mubr.f32.mxu0 0.0
        %2121 = vmatmul.mubr.f32.gmra.mrb[0].mxu0 %v1943
        %v2122 = vpop.f32.mrb[0].mxu0
        %v2123 = vadd.f32 0.0, %v2122
        %v2124 = vpop.f32.mrb[0].mxu0
        %2125 = vmatprep.mubr.f32.mxu0 0.0
        %2126 = vmatmul.mubr.f32.gmra.mrb[0].mxu0 %v1946
        %v2127 = vpop.f32.mrb[0].mxu0
        %v2128 = vadd.f32 0.0, %v2127
        %v2129 = vpop.f32.mrb[0].mxu0
        %2130 = vmatprep.mubr.f32.mxu0 0.0
        %2131 = vmatmul.mubr.f32.gmra.mrb[0].mxu0 %v1949
        %v2132 = vpop.f32.mrb[0].mxu0
        %v2133 = vadd.f32 0.0, %v2132
        %v2134 = vpop.f32.mrb[0].mxu0
        %2135 = vmatprep.mubr.f32.mxu0 0.0
        %2136 = vmatmul.mubr.f32.gmra.mrb[0].mxu0 %v1952
        %v2137 = vpop.f32.mrb[0].mxu0
        %v2138 = vadd.f32 0.0, %v2137
        %v2139 = vpop.f32.mrb[0].mxu0
        %2140 = vmatprep.mubr.f32.mxu0 0.0
        %2141 = vmatmul.mubr.f32.gmra.mrb[0].mxu0 %v1955
        %v2142 = vpop.f32.mrb[0].mxu0
        %v2143 = vadd.f32 0.0, %v2142
        %v2144 = vpop.f32.mrb[0].mxu0
        %2145 = vmatprep.mubr.f32.mxu0 0.0
        %2146 = vmatmul.mubr.f32.gmra.mrb[0].mxu0 %v1958
        %v2147 = vpop.f32.mrb[0].mxu0
        %v2148 = vadd.f32 0.0, %v2147
        %v2149 = vpop.f32.mrb[0].mxu0
        %2150 = vmatprep.mubr.f32.mxu0 0.0
        %2151 = vmatmul.mubr.f32.gmra.mrb[0].mxu0 %v1961
        %v2152 = vpop.f32.mrb[0].mxu0
        %v2153 = vadd.f32 0.0, %v2152
        %v2154 = vpop.f32.mrb[0].mxu0
        %2155 = vmatprep.mubr.f32.mxu0 0.0
        %2156 = vmatmul.mubr.f32.gmra.mrb[0].mxu0 %v1964
        %v2157 = vpop.f32.mrb[0].mxu0
        %v2158 = vadd.f32 0.0, %v2157
        %v2159 = vpop.f32.mrb[0].mxu0
        %2160 = vmatprep.mubr.f32.mxu0 0.0
        %2161 = vmatmul.mubr.f32.gmra.mrb[0].mxu0 %v1967
        %v2162 = vpop.f32.mrb[0].mxu0
        %v2163 = vadd.f32 0.0, %v2162
        %v2164 = vpop.f32.mrb[0].mxu0
        %2165 = vmatprep.mubr.f32.mxu0 0.0
        %2166 = vmatmul.mubr.f32.gmra.mrb[0].mxu0 %v1970
        %v2167 = vpop.f32.mrb[0].mxu0
        %v2168 = vadd.f32 0.0, %v2167
        %v2169 = vpop.f32.mrb[0].mxu0
        %2170 = vmatprep.mubr.f32.mxu0 0.0
        %2171 = vmatmul.mubr.f32.gmra.mrb[0].mxu0 %v1973
        %v2172 = vpop.f32.mrb[0].mxu0
        %v2173 = vadd.f32 0.0, %v2172
        %v2174 = vpop.f32.mrb[0].mxu0
        %2175 = vmatprep.mubr.f32.mxu0 0.0
        %2176 = vmatmul.mubr.f32.gmra.mrb[0].mxu0 %v1976
        %v2177 = vpop.f32.mrb[0].mxu0
        %v2178 = vadd.f32 0.0, %v2177
        %v2179 = vpop.f32.mrb[0].mxu0
        %2180 = vmatprep.mubr.f32.mxu0 0.0
        %2181 = vmatmul.mubr.f32.gmra.mrb[0].mxu0 %v1979
        %v2182 = vpop.f32.mrb[0].mxu0
        %v2183 = vadd.f32 0.0, %v2182
        %v2184 = vpop.f32.mrb[0].mxu0
        %2185 = vmatprep.mubr.f32.mxu0 0.0
        %2186 = vmatmul.mubr.f32.gmra.mrb[0].mxu0 %v1982
        %v2187 = vpop.f32.mrb[0].mxu0
        %v2188 = vadd.f32 0.0, %v2187
        %v2189 = vpop.f32.mrb[0].mxu0
        %2190 = vmatprep.mubr.f32.mxu0 0.0
        %2191 = vmatmul.mubr.f32.gmra.mrb[0].mxu0 %v1985
        %v2192 = vpop.f32.mrb[0].mxu0
        %v2193 = vadd.f32 0.0, %v2192
        %v2194 = vpop.f32.mrb[0].mxu0
        %2195 = vmatprep.mubr.f32.mxu0 0.0
        %2196 = vmatmul.mubr.f32.gmra.mrb[0].mxu0 %v1988
        %v2197 = vpop.f32.mrb[0].mxu0
        %v2198 = vadd.f32 0.0, %v2197
        %v2199 = vpop.f32.mrb[0].mxu0
        %2200 = vmatprep.mubr.f32.mxu0 0.0
        %2201 = vmatmul.mubr.f32.gmra.mrb[0].mxu0 %v1991
        %v2202 = vpop.f32.mrb[0].mxu0
        %v2203 = vadd.f32 0.0, %v2202
        %v2204 = vpop.f32.mrb[0].mxu0
        %2205 = vmatprep.mubr.f32.mxu0 0.0
        %2206 = vmatmul.mubr.f32.gmra.mrb[0].mxu0 %v1994
        %v2207 = vpop.f32.mrb[0].mxu0
        %v2208 = vadd.f32 0.0, %v2207
        %v2209 = vpop.f32.mrb[0].mxu0
        %2210 = vmatprep.mubr.f32.mxu0 0.0
        %2211 = vmatmul.mubr.f32.gmra.mrb[0].mxu0 %v1997
        %v2212 = vpop.f32.mrb[0].mxu0
        %v2213 = vadd.f32 0.0, %v2212
        %v2214 = vpop.f32.mrb[0].mxu0
        %2215 = vmatprep.mubr.f32.mxu0 0.0
        %2216 = vmatmul.mubr.f32.gmra.mrb[0].mxu0 %v2000
        %v2217 = vpop.f32.mrb[0].mxu0
        %v2218 = vadd.f32 0.0, %v2217
        %v2219 = vpop.f32.mrb[0].mxu0
        %2220 = vmatprep.mubr.f32.mxu0 0.0
        %2221 = vmatmul.mubr.f32.gmra.mrb[0].mxu0 %v2003
        %v2222 = vpop.f32.mrb[0].mxu0
        %v2223 = vadd.f32 0.0, %v2222
        %v2224 = vpop.f32.mrb[0].mxu0
        %2225 = vmatprep.mubr.f32.mxu0 0.0
        %2226 = vmatmul.mubr.f32.gmra.mrb[0].mxu0 %v2006
        %v2227 = vpop.f32.mrb[0].mxu0
        %v2228 = vadd.f32 0.0, %v2227
        %v2229 = vpop.f32.mrb[0].mxu0
        %2230 = vmatprep.mubr.f32.mxu0 0.0
        %2231 = vmatmul.mubr.f32.gmra.mrb[0].mxu0 %v2009
        %v2232 = vpop.f32.mrb[0].mxu0
        %v2233 = vadd.f32 0.0, %v2232
        %v2234 = vpop.f32.mrb[0].mxu0
        %2235 = vmatprep.mubr.f32.mxu0 0.0
        %2236 = vmatmul.mubr.f32.gmra.mrb[0].mxu0 %v2012
        %v2237 = vpop.f32.mrb[0].mxu0
        %v2238 = vadd.f32 0.0, %v2237
        %v2239 = vpop.f32.mrb[0].mxu0
        %2240 = vmatprep.mubr.f32.mxu0 0.0
        %2241 = vmatmul.mubr.f32.gmra.mrb[0].mxu0 %v2015
        %v2242 = vpop.f32.mrb[0].mxu0
        %v2243 = vadd.f32 0.0, %v2242
        %v2244 = vpop.f32.mrb[0].mxu0
        %2245 = vdwg.mxu0
        %v2246 = vld [vmem:[%s267] sm:$0x1]
        %v2248 = vlaneseq
        %v2249 = vshrl.u32 %v2248, 7
        %v2250 = vsub.s32 0, %v2249
        %v2251 = vrot.slane %v2246, %v2250
        %v2253 = vmul.f32 %v2088, %v2251
        %v2254 = vmul.f32 %v2093, %v2251
        %v2255 = vmul.f32 %v2098, %v2251
        %v2256 = vmul.f32 %v2103, %v2251
        %v2257 = vmul.f32 %v2108, %v2251
        %v2258 = vmul.f32 %v2113, %v2251
        %v2259 = vmul.f32 %v2118, %v2251
        %v2260 = vmul.f32 %v2123, %v2251
        %v2261 = vmul.f32 %v2128, %v2251
        %v2262 = vmul.f32 %v2133, %v2251
        %v2263 = vmul.f32 %v2138, %v2251
        %v2264 = vmul.f32 %v2143, %v2251
        %v2265 = vmul.f32 %v2148, %v2251
        %v2266 = vmul.f32 %v2153, %v2251
        %v2267 = vmul.f32 %v2158, %v2251
        %v2268 = vmul.f32 %v2163, %v2251
        %v2269 = vmul.f32 %v2168, %v2251
        %v2270 = vmul.f32 %v2173, %v2251
        %v2271 = vmul.f32 %v2178, %v2251
        %v2272 = vmul.f32 %v2183, %v2251
        %v2273 = vmul.f32 %v2188, %v2251
        %v2274 = vmul.f32 %v2193, %v2251
        %v2275 = vmul.f32 %v2198, %v2251
        %v2276 = vmul.f32 %v2203, %v2251
        %v2277 = vmul.f32 %v2208, %v2251
        %v2278 = vmul.f32 %v2213, %v2251
        %v2279 = vmul.f32 %v2218, %v2251
        %v2280 = vmul.f32 %v2223, %v2251
        %v2281 = vmul.f32 %v2228, %v2251
        %v2282 = vmul.f32 %v2233, %v2251
        %v2283 = vmul.f32 %v2238, %v2251
        %v2284 = vmul.f32 %v2243, %v2251
        %v2285 = vld [vmem:[%s270] sm:$0x1]
        %v2287 = vlaneseq
        %v2288 = vshrl.u32 %v2287, 7
        %v2289 = vsub.s32 0, %v2288
        %v2290 = vrot.slane %v2285, %v2289
        %v2292 = vadd.f32 %v2253, %v2290
        %v2293 = vadd.f32 %v2254, %v2290
        %v2294 = vadd.f32 %v2255, %v2290
        %v2295 = vadd.f32 %v2256, %v2290
        %v2296 = vadd.f32 %v2257, %v2290
        %v2297 = vadd.f32 %v2258, %v2290
        %v2298 = vadd.f32 %v2259, %v2290
        %v2299 = vadd.f32 %v2260, %v2290
        %v2300 = vadd.f32 %v2261, %v2290
        %v2301 = vadd.f32 %v2262, %v2290
        %v2302 = vadd.f32 %v2263, %v2290
        %v2303 = vadd.f32 %v2264, %v2290
        %v2304 = vadd.f32 %v2265, %v2290
        %v2305 = vadd.f32 %v2266, %v2290
        %v2306 = vadd.f32 %v2267, %v2290
        %v2307 = vadd.f32 %v2268, %v2290
        %v2308 = vadd.f32 %v2269, %v2290
        %v2309 = vadd.f32 %v2270, %v2290
        %v2310 = vadd.f32 %v2271, %v2290
        %v2311 = vadd.f32 %v2272, %v2290
        %v2312 = vadd.f32 %v2273, %v2290
        %v2313 = vadd.f32 %v2274, %v2290
        %v2314 = vadd.f32 %v2275, %v2290
        %v2315 = vadd.f32 %v2276, %v2290
        %v2316 = vadd.f32 %v2277, %v2290
        %v2317 = vadd.f32 %v2278, %v2290
        %v2318 = vadd.f32 %v2279, %v2290
        %v2319 = vadd.f32 %v2280, %v2290
        %v2320 = vadd.f32 %v2281, %v2290
        %v2321 = vadd.f32 %v2282, %v2290
        %v2322 = vadd.f32 %v2283, %v2290
        %v2323 = vadd.f32 %v2284, %v2290
        %v2324 = vxor.u32 %v2292, 2147483648
        %v2325 = vxor.u32 %v2293, 2147483648
        %v2326 = vxor.u32 %v2294, 2147483648
        %v2327 = vxor.u32 %v2295, 2147483648
        %v2328 = vxor.u32 %v2296, 2147483648
        %v2329 = vxor.u32 %v2297, 2147483648
        %v2330 = vxor.u32 %v2298, 2147483648
        %v2331 = vxor.u32 %v2299, 2147483648
        %v2332 = vxor.u32 %v2300, 2147483648
        %v2333 = vxor.u32 %v2301, 2147483648
        %v2334 = vxor.u32 %v2302, 2147483648
        %v2335 = vxor.u32 %v2303, 2147483648
        %v2336 = vxor.u32 %v2304, 2147483648
        %v2337 = vxor.u32 %v2305, 2147483648
        %v2338 = vxor.u32 %v2306, 2147483648
        %v2339 = vxor.u32 %v2307, 2147483648
        %v2340 = vxor.u32 %v2308, 2147483648
        %v2341 = vxor.u32 %v2309, 2147483648
        %v2342 = vxor.u32 %v2310, 2147483648
        %v2343 = vxor.u32 %v2311, 2147483648
        %v2344 = vxor.u32 %v2312, 2147483648
        %v2345 = vxor.u32 %v2313, 2147483648
        %v2346 = vxor.u32 %v2314, 2147483648
        %v2347 = vxor.u32 %v2315, 2147483648
        %v2348 = vxor.u32 %v2316, 2147483648
        %v2349 = vxor.u32 %v2317, 2147483648
        %v2350 = vxor.u32 %v2318, 2147483648
        %v2351 = vxor.u32 %v2319, 2147483648
        %v2352 = vxor.u32 %v2320, 2147483648
        %v2353 = vxor.u32 %v2321, 2147483648
        %v2354 = vxor.u32 %v2322, 2147483648
        %v2355 = vxor.u32 %v2323, 2147483648
        %v2356 = vmul.f32 %v2324, 1.442695
        %v2357 = vpow.pop %v2356
        %v2358 = vmul.f32 %v2325, 1.442695
        %v2359 = vpow.pop %v2358
        %v2360 = vmul.f32 %v2326, 1.442695
        %v2361 = vpow.pop %v2360
        %v2362 = vmul.f32 %v2327, 1.442695
        %v2363 = vpow.pop %v2362
        %v2364 = vmul.f32 %v2328, 1.442695
        %v2365 = vpow.pop %v2364
        %v2366 = vmul.f32 %v2329, 1.442695
        %v2367 = vpow.pop %v2366
        %v2368 = vmul.f32 %v2330, 1.442695
        %v2369 = vpow.pop %v2368
        %v2370 = vmul.f32 %v2331, 1.442695
        %v2371 = vpow.pop %v2370
        %v2372 = vmul.f32 %v2332, 1.442695
        %v2373 = vpow.pop %v2372
        %v2374 = vmul.f32 %v2333, 1.442695
        %v2375 = vpow.pop %v2374
        %v2376 = vmul.f32 %v2334, 1.442695
        %v2377 = vpow.pop %v2376
        %v2378 = vmul.f32 %v2335, 1.442695
        %v2379 = vpow.pop %v2378
        %v2380 = vmul.f32 %v2336, 1.442695
        %v2381 = vpow.pop %v2380
        %v2382 = vmul.f32 %v2337, 1.442695
        %v2383 = vpow.pop %v2382
        %v2384 = vmul.f32 %v2338, 1.442695
        %v2385 = vpow.pop %v2384
        %v2386 = vmul.f32 %v2339, 1.442695
        %v2387 = vpow.pop %v2386
        %v2388 = vmul.f32 %v2340, 1.442695
        %v2389 = vpow.pop %v2388
        %v2390 = vmul.f32 %v2341, 1.442695
        %v2391 = vpow.pop %v2390
        %v2392 = vmul.f32 %v2342, 1.442695
        %v2393 = vpow.pop %v2392
        %v2394 = vmul.f32 %v2343, 1.442695
        %v2395 = vpow.pop %v2394
        %v2396 = vmul.f32 %v2344, 1.442695
        %v2397 = vpow.pop %v2396
        %v2398 = vmul.f32 %v2345, 1.442695
        %v2399 = vpow.pop %v2398
        %v2400 = vmul.f32 %v2346, 1.442695
        %v2401 = vpow.pop %v2400
        %v2402 = vmul.f32 %v2347, 1.442695
        %v2403 = vpow.pop %v2402
        %v2404 = vmul.f32 %v2348, 1.442695
        %v2405 = vpow.pop %v2404
        %v2406 = vmul.f32 %v2349, 1.442695
        %v2407 = vpow.pop %v2406
        %v2408 = vmul.f32 %v2350, 1.442695
        %v2409 = vpow.pop %v2408
        %v2410 = vmul.f32 %v2351, 1.442695
        %v2411 = vpow.pop %v2410
        %v2412 = vmul.f32 %v2352, 1.442695
        %v2413 = vpow.pop %v2412
        %v2414 = vmul.f32 %v2353, 1.442695
        %v2415 = vpow.pop %v2414
        %v2416 = vmul.f32 %v2354, 1.442695
        %v2417 = vpow.pop %v2416
        %v2418 = vmul.f32 %v2355, 1.442695
        %v2419 = vpow.pop %v2418
        %v2420 = vadd.f32 %v2357, 1.0
        %v2421 = vadd.f32 %v2359, 1.0
        %v2422 = vadd.f32 %v2361, 1.0
        %v2423 = vadd.f32 %v2363, 1.0
        %v2424 = vadd.f32 %v2365, 1.0
        %v2425 = vadd.f32 %v2367, 1.0
        %v2426 = vadd.f32 %v2369, 1.0
        %v2427 = vadd.f32 %v2371, 1.0
        %v2428 = vadd.f32 %v2373, 1.0
        %v2429 = vadd.f32 %v2375, 1.0
        %v2430 = vadd.f32 %v2377, 1.0
        %v2431 = vadd.f32 %v2379, 1.0
        %v2432 = vadd.f32 %v2381, 1.0
        %v2433 = vadd.f32 %v2383, 1.0
        %v2434 = vadd.f32 %v2385, 1.0
        %v2435 = vadd.f32 %v2387, 1.0
        %v2436 = vadd.f32 %v2389, 1.0
        %v2437 = vadd.f32 %v2391, 1.0
        %v2438 = vadd.f32 %v2393, 1.0
        %v2439 = vadd.f32 %v2395, 1.0
        %v2440 = vadd.f32 %v2397, 1.0
        %v2441 = vadd.f32 %v2399, 1.0
        %v2442 = vadd.f32 %v2401, 1.0
        %v2443 = vadd.f32 %v2403, 1.0
        %v2444 = vadd.f32 %v2405, 1.0
        %v2445 = vadd.f32 %v2407, 1.0
        %v2446 = vadd.f32 %v2409, 1.0
        %v2447 = vadd.f32 %v2411, 1.0
        %v2448 = vadd.f32 %v2413, 1.0
        %v2449 = vadd.f32 %v2415, 1.0
        %v2450 = vadd.f32 %v2417, 1.0
        %v2451 = vadd.f32 %v2419, 1.0
        %v2452 = vrcp.pop %v2420
        %v2453 = vmul.f32 1.0, %v2452
        %v2454 = vrcp.pop %v2421
        %v2455 = vmul.f32 1.0, %v2454
        %v2456 = vrcp.pop %v2422
        %v2457 = vmul.f32 1.0, %v2456
        %v2458 = vrcp.pop %v2423
        %v2459 = vmul.f32 1.0, %v2458
        %v2460 = vrcp.pop %v2424
        %v2461 = vmul.f32 1.0, %v2460
        %v2462 = vrcp.pop %v2425
        %v2463 = vmul.f32 1.0, %v2462
        %v2464 = vrcp.pop %v2426
        %v2465 = vmul.f32 1.0, %v2464
        %v2466 = vrcp.pop %v2427
        %v2467 = vmul.f32 1.0, %v2466
        %v2468 = vrcp.pop %v2428
        %v2469 = vmul.f32 1.0, %v2468
        %v2470 = vrcp.pop %v2429
        %v2471 = vmul.f32 1.0, %v2470
        %v2472 = vrcp.pop %v2430
        %v2473 = vmul.f32 1.0, %v2472
        %v2474 = vrcp.pop %v2431
        %v2475 = vmul.f32 1.0, %v2474
        %v2476 = vrcp.pop %v2432
        %v2477 = vmul.f32 1.0, %v2476
        %v2478 = vrcp.pop %v2433
        %v2479 = vmul.f32 1.0, %v2478
        %v2480 = vrcp.pop %v2434
        %v2481 = vmul.f32 1.0, %v2480
        %v2482 = vrcp.pop %v2435
        %v2483 = vmul.f32 1.0, %v2482
        %v2484 = vrcp.pop %v2436
        %v2485 = vmul.f32 1.0, %v2484
        %v2486 = vrcp.pop %v2437
        %v2487 = vmul.f32 1.0, %v2486
        %v2488 = vrcp.pop %v2438
        %v2489 = vmul.f32 1.0, %v2488
        %v2490 = vrcp.pop %v2439
        %v2491 = vmul.f32 1.0, %v2490
        %v2492 = vrcp.pop %v2440
        %v2493 = vmul.f32 1.0, %v2492
        %v2494 = vrcp.pop %v2441
        %v2495 = vmul.f32 1.0, %v2494
        %v2496 = vrcp.pop %v2442
        %v2497 = vmul.f32 1.0, %v2496
        %v2498 = vrcp.pop %v2443
        %v2499 = vmul.f32 1.0, %v2498
        %v2500 = vrcp.pop %v2444
        %v2501 = vmul.f32 1.0, %v2500
        %v2502 = vrcp.pop %v2445
        %v2503 = vmul.f32 1.0, %v2502
        %v2504 = vrcp.pop %v2446
        %v2505 = vmul.f32 1.0, %v2504
        %v2506 = vrcp.pop %v2447
        %v2507 = vmul.f32 1.0, %v2506
        %v2508 = vrcp.pop %v2448
        %v2509 = vmul.f32 1.0, %v2508
        %v2510 = vrcp.pop %v2449
        %v2511 = vmul.f32 1.0, %v2510
        %v2512 = vrcp.pop %v2450
        %v2513 = vmul.f32 1.0, %v2512
        %v2514 = vrcp.pop %v2451
        %v2515 = vmul.f32 1.0, %v2514
        %v2516 = vmul.f32 %v2292, %v2453
        %v2517 = vmul.f32 %v2293, %v2455
        %v2518 = vmul.f32 %v2294, %v2457
        %v2519 = vmul.f32 %v2295, %v2459
        %v2520 = vmul.f32 %v2296, %v2461
        %v2521 = vmul.f32 %v2297, %v2463
        %v2522 = vmul.f32 %v2298, %v2465
        %v2523 = vmul.f32 %v2299, %v2467
        %v2524 = vmul.f32 %v2300, %v2469
        %v2525 = vmul.f32 %v2301, %v2471
        %v2526 = vmul.f32 %v2302, %v2473
        %v2527 = vmul.f32 %v2303, %v2475
        %v2528 = vmul.f32 %v2304, %v2477
        %v2529 = vmul.f32 %v2305, %v2479
        %v2530 = vmul.f32 %v2306, %v2481
        %v2531 = vmul.f32 %v2307, %v2483
        %v2532 = vmul.f32 %v2308, %v2485
        %v2533 = vmul.f32 %v2309, %v2487
        %v2534 = vmul.f32 %v2310, %v2489
        %v2535 = vmul.f32 %v2311, %v2491
        %v2536 = vmul.f32 %v2312, %v2493
        %v2537 = vmul.f32 %v2313, %v2495
        %v2538 = vmul.f32 %v2314, %v2497
        %v2539 = vmul.f32 %v2315, %v2499
        %v2540 = vmul.f32 %v2316, %v2501
        %v2541 = vmul.f32 %v2317, %v2503
        %v2542 = vmul.f32 %v2318, %v2505
        %v2543 = vmul.f32 %v2319, %v2507
        %v2544 = vmul.f32 %v2320, %v2509
        %v2545 = vmul.f32 %v2321, %v2511
        %v2546 = vmul.f32 %v2322, %v2513
        %v2547 = vmul.f32 %v2323, %v2515
        %2548 = vst [vmem:[%s253] sm:$0xff] %v2516
        %2549 = vst [vmem:[%s253 + $0x8] sm:$0xff] %v2517
        %2550 = vst [vmem:[%s253 + $0x10] sm:$0xff] %v2518
        %2551 = vst [vmem:[%s253 + $0x18] sm:$0xff] %v2519
        %2552 = vst [vmem:[%s253 + $0x20] sm:$0xff] %v2520
        %2553 = vst [vmem:[%s253 + $0x28] sm:$0xff] %v2521
        %2554 = vst [vmem:[%s253 + $0x30] sm:$0xff] %v2522
        %2555 = vst [vmem:[%s253 + $0x38] sm:$0xff] %v2523
        %2556 = vst [vmem:[%s253 + $0x40] sm:$0xff] %v2524
        %2557 = vst [vmem:[%s253 + $0x48] sm:$0xff] %v2525
        %2558 = vst [vmem:[%s253 + $0x50] sm:$0xff] %v2526
        %2559 = vst [vmem:[%s253 + $0x58] sm:$0xff] %v2527
        %2560 = vst [vmem:[%s253 + $0x60] sm:$0xff] %v2528
        %2561 = vst [vmem:[%s253 + $0x68] sm:$0xff] %v2529
        %2562 = vst [vmem:[%s253 + $0x70] sm:$0xff] %v2530
        %2563 = vst [vmem:[%s253 + $0x78] sm:$0xff] %v2531
        %2564 = vst [vmem:[%s253 + $0x80] sm:$0xff] %v2532
        %2565 = vst [vmem:[%s253 + $0x88] sm:$0xff] %v2533
        %2566 = vst [vmem:[%s253 + $0x90] sm:$0xff] %v2534
        %2567 = vst [vmem:[%s253 + $0x98] sm:$0xff] %v2535
        %2568 = vst [vmem:[%s253 + $0xa0] sm:$0xff] %v2536
        %2569 = vst [vmem:[%s253 + $0xa8] sm:$0xff] %v2537
        %2570 = vst [vmem:[%s253 + $0xb0] sm:$0xff] %v2538
        %2571 = vst [vmem:[%s253 + $0xb8] sm:$0xff] %v2539
        %2572 = vst [vmem:[%s253 + $0xc0] sm:$0xff] %v2540
        %2573 = vst [vmem:[%s253 + $0xc8] sm:$0xff] %v2541
        %2574 = vst [vmem:[%s253 + $0xd0] sm:$0xff] %v2542
        %2575 = vst [vmem:[%s253 + $0xd8] sm:$0xff] %v2543
        %2576 = vst [vmem:[%s253 + $0xe0] sm:$0xff] %v2544
        %2577 = vst [vmem:[%s253 + $0xe8] sm:$0xff] %v2545
        %2578 = vst [vmem:[%s253 + $0xf0] sm:$0xff] %v2546
        %2579 = vst [vmem:[%s253 + $0xf8] sm:$0xff] %v2547
        %s2580 = sand.u32 %s155, 1
        %s2581 = scalar_lea.sflag [#allocation4], %s2580
        %s2582 = sand.u32 %s155, 1
        %s2583 = smul.addr %s2582, 256
        %s2584 = scalar_lea.vmem [#allocation3], %s2583
        // Predicated region
        $region37: #{tpu_custom_call.1} parent=35 // pred_check
          %p2585 = pneg %p165
        $region38: #{tpu_custom_call.1} parent=35 // pred_check_branch
          %2587 = sbr.rel (%p2585) target = $region40
        $region39: #{tpu_custom_call.1} parent=35 // pred_region
          %s2588 = smul.u32 16, %s24
          %s2590 = ssub.s32 4096, 4096
          %2591 = vsyncadd %s2581, %s2590
          %s2592 = smul.addr %s2588, 2
          %s2593 = sadd.s32 %s25, %s2592
          %s2594 = smul.addr %s23, 32
          %s2595 = sadd.s32 %s2593, %s2594
          %s2596 = smul.addr %s2595, 128
          %s2597 = scalar_lea.hbm %s4, %s2596
          %s2598 = sshll.u32 %s2584, 4
          %s2599 = int_to_ptr.vmem [resolvable:$true] %s2598
          %2604 = dma.vmem_to_hbm [thread:$0]  %s2599, 4096, %s2597, %s2581, 128, 128, 8
        $region40: #{tpu_custom_call.1} parent=35 // pred_fallthru
          _
      $region36: #{tpu_custom_call.1} parent=5 // pred_fallthru
        _
      %p2605 = scmp.le.s32.totalorder 2, %s13
      // Predicated region
      $region41: #{tpu_custom_call.1} parent=5 // pred_check
        %p2606 = pneg %p2605
      $region42: #{tpu_custom_call.1} parent=5 // pred_check_branch
        %2608 = sbr.rel (%p2606) target = $region44
      $region43: #{tpu_custom_call.1} parent=5 // pred_region
        %s2609 = ssub.s32 %s13, 2
        // Predicated region
        $region45: #{tpu_custom_call.1} parent=43 // pred_check
          %p2610 = pneg %p171
        $region46: #{tpu_custom_call.1} parent=43 // pred_check_branch
          %2612 = sbr.rel (%p2610) target = $region48
        $region47: #{tpu_custom_call.1} parent=43 // pred_region
          %s2613 = sand.u32 %s156, 1
          %s2614 = scalar_lea.sflag [#allocation4], %s2613
          %s2615 = sand.u32 %s156, 1
          %s2616 = smul.addr %s2615, 256
          %s2617 = scalar_lea.vmem [#allocation3], %s2616
          %2618 = dma.done %s2614, 4096
        $region48: #{tpu_custom_call.1} parent=43 // pred_fallthru
          _
      $region44: #{tpu_custom_call.1} parent=5 // pred_fallthru
        _
    $region6: #{tpu_custom_call.1} parent=1 // loop_footer
      %s17 = sadd.s32 1, %s13
    $region7: #{tpu_custom_call.1} parent=1 // loop_footer_branch
      %12 = sbr.rel target = $region3
    $region8: #{tpu_custom_call.1} parent=1 // loop_exit
      _
    %2619 = vsyncpa [#allocation4], 1
    %s2620 = scalar_lea.sflag [#allocation4], 1
    %2621 = vsyncpa %s2620, 1

</llo_original>
